<compile_context>
chip_gen: v7x
topology: tpu7x:2x2x1
jax: 0.10.0
libtpu: 0.0.40
codegen_flags: <defaults>
</compile_context>

<pallas_src>
import functools

import jax
import jax.numpy as jnp
from jax import lax
from jax.experimental import pallas as pl
from jax.experimental.pallas import tpu as pltpu


def _linear_attention_kernel(x_ref, wq_ref, bq_ref, wkT_ref, bkT_ref,
                             wv_ref, bv_ref, gamma_ref, o_ref,
                             kT_scr, v_scr, *, n_valid):
    """One (batch b, output-column tile j) grid step.

    x_ref  : (C, Np)    f32   full (padded) spatial slab of batch b
    o_ref  : (C, TN)          output columns of this tile
    kT_scr : (Np, Cr)   bf16  pre-transposed key projection (per-batch cache)
    v_scr  : (C+1, Np)  bf16  value projection + trailing ones row (per batch)
    """
    j = pl.program_id(1)
    c, tn = o_ref.shape
    n_padded = x_ref.shape[-1]

    # ---- per-batch k / v projections: computed once (j == 0), cached in VMEM
    @pl.when(j == 0)
    def _():
        x_full = x_ref[...]                                              # (C, Np)

        # k^T directly: contract x's channel axis with wk^T's channel axis,
        # giving (Np, Cr) with no per-tile transpose later.
        kT = lax.dot_general(
            x_full, wkT_ref[...],
            dimension_numbers=(((0,), (0,)), ((), ())),
            preferred_element_type=jnp.float32) + bkT_ref[...]           # (Np, Cr)
        kT_scr[...] = kT.astype(kT_scr.dtype)

        # v projection; wv/bv were augmented in the wrapper with a zero row /
        # unit bias so row C of v_aug is exactly 1.0 -> the big matmul below
        # produces the L1 denominator for free.
        v_aug = jnp.dot(wv_ref[...], x_full,
                        preferred_element_type=jnp.float32) + bv_ref[...]  # (C+1, Np)
        if n_padded != n_valid:
            # Zero padded key columns so they contribute neither to the output
            # nor to the L1 denominator (ones row included).
            lane = lax.broadcasted_iota(jnp.int32, (1, n_padded), 1)
            v_aug = jnp.where(lane < n_valid, v_aug, 0.0)
        v_scr[...] = v_aug.astype(v_scr.dtype)

    # ---- query projection for this column tile only ----
    col0 = pl.multiple_of(j * tn, tn)
    x_cols = x_ref[:, pl.ds(col0, tn)]                                   # (C, TN)
    q = jnp.dot(wq_ref[...], x_cols,
                preferred_element_type=jnp.float32) + bq_ref[...]        # (Cr, TN)

    # ---- attention scores: single bf16 MXU pass, f32 accumulation ----
    attn = jnp.dot(kT_scr[...], q.astype(jnp.bfloat16),
                   preferred_element_type=jnp.float32)                   # (Np, TN)
    attn = jnp.maximum(attn, 0.0).astype(jnp.bfloat16)                   # ReLU

    # ---- out_aug = [v; 1] @ attn : bf16 inputs, f32 accumulation (MXU) ----
    out_aug = jnp.dot(v_scr[...], attn,
                      preferred_element_type=jnp.float32)                # (C+1, TN)
    denom = out_aug[c:, :]                                               # (1, TN)
    inv = pl.reciprocal(jnp.maximum(denom, 1e-12), approx=True)          # EUP slot
    out = out_aug[:c, :] * inv                                           # L1 normalize

    # residual: gamma * out + x  (gamma is a scalar living in SMEM)
    o_ref[...] = (gamma_ref[0] * out + x_cols).astype(o_ref.dtype)


# ---------------------------------------------------------------------------
# wrapper helpers
# ---------------------------------------------------------------------------
def _round_up(a, m):
    return -(-a // m) * m


def _vmem_capacity_bytes():
    try:
        return int(pltpu.get_tpu_info().vmem_capacity_bytes)
    except Exception:
        return 64 * 1024 * 1024          # conservative (v7x-sized) fallback


def _pad_tile(rows, cols, dtype_bytes):
    sub = 8 * (4 // dtype_bytes)         # 8 sublanes for f32, 16 for bf16
    return _round_up(max(rows, 1), sub) * _round_up(max(cols, 1), 128) * dtype_bytes


def _vmem_estimate(c, cr, np_, tn):
    est = 0
    est += 2 * _pad_tile(c, np_, 4)      # x slab (f32, double-buffered by pipeline)
    est += 2 * _pad_tile(c, tn, 4)       # output tile (f32, double-buffered)
    est += _pad_tile(np_, cr, 2)         # k^T scratch (bf16)
    est += _pad_tile(c + 1, np_, 2)      # [v; 1] scratch (bf16)
    est += 2 * _pad_tile(np_, tn, 4)     # attn tile f32 + elementwise temp
    est += _pad_tile(np_, tn, 2)         # attn tile bf16 cast
    est += 2 * _pad_tile(c + 1, tn, 4)   # out_aug + normalized copy
    # weights / biases (double-buffered, tiny but padded to (8,128) tiles)
    est += 2 * (_pad_tile(cr, c, 4) + _pad_tile(c, cr, 4) + _pad_tile(c + 1, c, 4)
                + _pad_tile(cr, 1, 4) + _pad_tile(1, cr, 4) + _pad_tile(c + 1, 1, 4))
    return int(est * 1.25)               # DMA descriptors / misc headroom


def _choose_tile(np_, requested, c, cr, cap):
    """Largest multiple of 128 dividing np_ that is <= requested and fits VMEM."""
    candidates = [d for d in range(128, np_ + 1, 128) if np_ % d == 0]
    requested = max(min(requested, np_), 128)
    fitting = [d for d in candidates
               if d <= requested and _vmem_estimate(c, cr, np_, d) <= cap]
    return max(fitting) if fitting else 128


def linear_attention(x, wq, bq, wk, bk, wv, bv, gamma, *, tn=512):
    """x: (B, C, H, W) float32 -> (B, C, H, W) float32 (PyTorch LinearAttention)."""
    B, C, H, W = x.shape
    N = H * W
    Cr = wq.shape[0]

    # Pad the flattened spatial axis to a lane-dense multiple of 128 so the
    # score tile stays tiled (never a full (N, N) slab) and stores are unmasked.
    Np = _round_up(N, 128)
    x_flat = x.reshape(B, C, N).astype(jnp.float32)
    if Np != N:
        x_flat = jnp.pad(x_flat, ((0, 0), (0, 0), (0, Np - N)))

    cap = int(0.75 * _vmem_capacity_bytes())
    TN = _choose_tile(Np, tn, C, Cr, cap)
    num_col_tiles = Np // TN
    vmem_limit = int(min(cap, max(_vmem_estimate(C, Cr, Np, TN), 32 * 1024 * 1024)))

    # Parameter prep (tiny, trace-time): biases as 2-D rows/columns, key weight
    # pre-transposed, value weight augmented with a zero row + unit bias so the
    # kernel's big matmul emits the L1 denominator as its last row.
    wq2 = wq.astype(jnp.float32)
    bq2 = bq.reshape(Cr, 1).astype(jnp.float32)
    wkT = wk.astype(jnp.float32).T                                     # (C, Cr)
    bkT = bk.reshape(1, Cr).astype(jnp.float32)
    wv_aug = jnp.concatenate(
        [wv.astype(jnp.float32), jnp.zeros((1, C), jnp.float32)], axis=0)   # (C+1, C)
    bv_aug = jnp.concatenate(
        [bv.astype(jnp.float32), jnp.ones((1,), jnp.float32)], axis=0
    ).reshape(C + 1, 1)
    gamma1 = gamma.reshape(1).astype(jnp.float32)

    full = lambda b, j: (0, 0)
    grid_spec = pltpu.PrefetchScalarGridSpec(
        num_scalar_prefetch=0,
        grid=(B, num_col_tiles),
        in_specs=[
            # Full (C, Np) slab of batch b; block index constant in j so it is
            # fetched once per batch.  NOTE: the pipeline double-buffers this
            # slab; on v7x it could be single-buffered with a manual DMA at
            # j == 0 to halve its footprint (not done here for simplicity).
            pl.BlockSpec((None, C, Np), lambda b, j: (b, 0, 0)),
            pl.BlockSpec((Cr, C), full),                          # wq
            pl.BlockSpec((Cr, 1), full),                          # bq
            pl.BlockSpec((C, Cr), full),                          # wk^T
            pl.BlockSpec((1, Cr), full),                          # bk (row)
            pl.BlockSpec((C + 1, C), full),                       # wv (+ zero row)
            pl.BlockSpec((C + 1, 1), full),                       # bv (+ unit)
            pl.BlockSpec(memory_space=pltpu.MemorySpace.SMEM),    # gamma scalar
        ],
        # lane-dense output column tile (TN is always a multiple of 128)
        out_specs=pl.BlockSpec((None, C, TN), lambda b, j: (b, 0, j)),
        scratch_shapes=[
            pltpu.VMEM((Np, Cr), jnp.bfloat16),      # k^T cache (per batch)
            pltpu.VMEM((C + 1, Np), jnp.bfloat16),   # [v; 1] cache (per batch)
        ],
    )

    kernel = functools.partial(_linear_attention_kernel, n_valid=N)
    out_flat = pl.pallas_call(
        kernel,
        out_shape=jax.ShapeDtypeStruct((B, C, Np), x.dtype),
        grid_spec=grid_spec,
        compiler_params=pltpu.CompilerParams(
            # The column axis carries the per-batch k/v scratch written at
            # j == 0, so it stays "arbitrary"; batch is "parallel".
            dimension_semantics=("parallel", "arbitrary"),
            vmem_limit_bytes=vmem_limit,
        ),
    )(x_flat, wq2, bq2, wkT, bkT, wv_aug, bv_aug, gamma1)

    return out_flat[:, :, :N].reshape(B, C, H, W)


def linear_attention_ref(x, wq, bq, wk, bk, wv, bv, gamma):
    """Pure-JAX reference matching the PyTorch forward (f32 everywhere)."""
    B, C, H, W = x.shape
    N = H * W
    xf = x.reshape(B, C, N)
    q = jnp.einsum('rc,bcn->brn', wq, xf) + bq[None, :, None]        # (B, Cr, N)
    k = jnp.einsum('rc,bcn->brn', wk, xf) + bk[None, :, None]        # (B, Cr, N)
    v = jnp.einsum('oc,bcn->bon', wv, xf) + bv[None, :, None]        # (B, C,  N)
    attn = jnp.einsum('bci,bcj->bij', k, q)                          # (B, N, N)
    attn = jnp.maximum(attn, 0.0)
    denom = jnp.sum(attn, axis=1, keepdims=True)
    attn = attn / jnp.maximum(denom, 1e-12)
    out = jnp.einsum('bcn,bnj->bcj', v, attn)                        # (B, C, N)
    return (gamma.reshape(()) * out + xf).reshape(B, C, H, W)


if __name__ == "__main__":
    def _init_params(key, C):
        Cr = max(C // 8, 1)
        k1, k2, k3, k4, k5, k6 = jax.random.split(key, 6)
        scale = 1.0 / jnp.sqrt(jnp.float32(C))
        wq = jax.random.uniform(k1, (Cr, C), jnp.float32, -scale, scale)
        bq = jax.random.uniform(k2, (Cr,), jnp.float32, -scale, scale)
        wk = jax.random.uniform(k3, (Cr, C), jnp.float32, -scale, scale)
        bk = jax.random.uniform(k4, (Cr,), jnp.float32, -scale, scale)
        wv = jax.random.uniform(k5, (C, C), jnp.float32, -scale, scale)
        bv = jax.random.uniform(k6, (C,), jnp.float32, -scale, scale)
        # PyTorch initializes gamma to zero; use a nonzero value so the
        # attention path is actually exercised by the numerical check.
        gamma = jnp.array([0.5], dtype=jnp.float32)
        return wq, bq, wk, bk, wv, bv, gamma

    key = jax.random.PRNGKey(0)
    kx1, kp1, kx2, kp2 = jax.random.split(key, 4)

    # Case 1: N = 256, tn=128 -> two column tiles; exercises the per-batch
    # k/v caching under @pl.when(j == 0) and the tiled path.
    B, C, H, W = 2, 4, 16, 16
    x = jax.random.normal(kx1, (B, C, H, W), dtype=jnp.float32)
    p = _init_params(kp1, C)
    out = jax.block_until_ready(linear_attention(x, *p, tn=128))
    ref = linear_attention_ref(x, *p)
    assert out.shape == x.shape
    # Tolerance accounts for bf16 operands on both MXU matmuls (f32 accum),
    # the MXU-computed L1 denominator, and the approximate EUP reciprocal.
    assert jnp.allclose(out, ref, atol=3e-2, rtol=3e-2), "case 1 mismatch vs reference"

    # Case 2: N = 64 (not a multiple of 128) -> padded + masked path.
    B2, C2, H2, W2 = 2, 4, 8, 8
    x2 = jax.random.normal(kx2, (B2, C2, H2, W2), dtype=jnp.float32)
    p2 = _init_params(kp2, C2)
    out2 = jax.block_until_ready(linear_attention(x2, *p2))
    ref2 = linear_attention_ref(x2, *p2)
    assert out2.shape == x2.shape
    assert jnp.allclose(out2, ref2, atol=3e-2, rtol=3e-2), "case 2 mismatch vs reference"

    print("KERNEL_OK")
</pallas_src>

<mosaic_0001>
module attributes {stable_mosaic.version = 11 : i64} {
  func.func @_linear_attention_kernel(%arg0: i32, %arg1: i32, %arg2: memref<1x4x256xf32, #tpu.memory_space<vmem>>, %arg3: memref<1x4xf32, #tpu.memory_space<vmem>>, %arg4: memref<1x1xf32, #tpu.memory_space<vmem>>, %arg5: memref<4x1xf32, #tpu.memory_space<vmem>>, %arg6: memref<1x1xf32, #tpu.memory_space<vmem>>, %arg7: memref<5x4xf32, #tpu.memory_space<vmem>>, %arg8: memref<5x1xf32, #tpu.memory_space<vmem>>, %arg9: memref<1xf32, #tpu.memory_space<smem>>, %arg10: memref<1x4x128xf32, #tpu.memory_space<vmem>>, %arg11: memref<256x1xbf16, #tpu.memory_space<vmem>>, %arg12: memref<5x256xbf16, #tpu.memory_space<vmem>>) attributes {dimension_semantics = [#tpu.dimension_semantics<parallel>, #tpu.dimension_semantics<arbitrary>], iteration_bounds = array<i64: 2, 2>, scalar_prefetch = 0 : i64, scratch_operands = 2 : i64, tpu.core_type = #tpu.core_type<tc>, window_params = [{transform_indices = @transform_0, window_bounds = array<i64: 1, 4, 256>}, {pipeline_mode = #tpu.pipeline_mode<synchronous>, transform_indices = @transform_1, window_bounds = array<i64: 1, 4>}, {pipeline_mode = #tpu.pipeline_mode<synchronous>, transform_indices = @transform_2, window_bounds = array<i64: 1, 1>}, {pipeline_mode = #tpu.pipeline_mode<synchronous>, transform_indices = @transform_3, window_bounds = array<i64: 4, 1>}, {pipeline_mode = #tpu.pipeline_mode<synchronous>, transform_indices = @transform_4, window_bounds = array<i64: 1, 1>}, {pipeline_mode = #tpu.pipeline_mode<synchronous>, transform_indices = @transform_5, window_bounds = array<i64: 5, 4>}, {pipeline_mode = #tpu.pipeline_mode<synchronous>, transform_indices = @transform_6, window_bounds = array<i64: 5, 1>}, {transform_indices = @transform_7, window_bounds = array<i64: 1>}, {transform_indices = @transform_8, window_bounds = array<i64: 1, 4, 128>}]} {
    %c0_i32 = arith.constant 0 : i32
    %0 = arith.cmpi eq, %arg1, %c0_i32 : i32
    %1 = arith.extui %0 : i1 to i32
    %c0_i32_0 = arith.constant 0 : i32
    %2 = arith.cmpi ne, %1, %c0_i32_0 : i32
    scf.if %2 {
      %c0_18 = arith.constant 0 : index
      %c0_19 = arith.constant 0 : index
      %c0_20 = arith.constant 0 : index
      %35 = vector.load %arg2[%c0_18, %c0_19, %c0_20] : memref<1x4x256xf32, #tpu.memory_space<vmem>>, vector<1x4x256xf32>
      %36 = vector.shape_cast %35 : vector<1x4x256xf32> to vector<4x256xf32>
      %c0_21 = arith.constant 0 : index
      %c0_22 = arith.constant 0 : index
      %37 = vector.load %arg5[%c0_21, %c0_22] : memref<4x1xf32, #tpu.memory_space<vmem>>, vector<4x1xf32>
      %cst_23 = arith.constant dense<0.000000e+00> : vector<256x1xf32>
      %38 = tpu.matmul %36, %37, %cst_23 {dimension_numbers = #tpu.dot_dimension_numbers<[0], [0], [1], [1], [0, 1, 1, 1], [], []>} : vector<4x256xf32>, vector<4x1xf32>, vector<256x1xf32> -> vector<256x1xf32>
      %c0_24 = arith.constant 0 : index
      %c0_25 = arith.constant 0 : index
      %39 = vector.load %arg6[%c0_24, %c0_25] : memref<1x1xf32, #tpu.memory_space<vmem>>, vector<1x1xf32>
      %40 = vector.broadcast %39 : vector<1x1xf32> to vector<256x1xf32>
      %41 = arith.addf %38, %40 : vector<256x1xf32>
      %42 = arith.truncf %41 : vector<256x1xf32> to vector<256x1xbf16>
      %c0_26 = arith.constant 0 : index
      %c0_27 = arith.constant 0 : index
      %43 = vector.load %arg11[%c0_26, %c0_27] : memref<256x1xbf16, #tpu.memory_space<vmem>>, vector<256x1xbf16>
      tpu.vector_store %arg11[%c0_26, %c0_27], %42 {strides = array<i32>} : memref<256x1xbf16, #tpu.memory_space<vmem>>, vector<256x1xbf16>,
      %c0_28 = arith.constant 0 : index
      %c0_29 = arith.constant 0 : index
      %44 = vector.load %arg7[%c0_28, %c0_29] : memref<5x4xf32, #tpu.memory_space<vmem>>, vector<5x4xf32>
      %cst_30 = arith.constant dense<0.000000e+00> : vector<5x256xf32>
      %45 = tpu.matmul %44, %36, %cst_30 {dimension_numbers = #tpu.dot_dimension_numbers<[1], [0], [0], [1], [0, 0, 1, 1], [], []>} : vector<5x4xf32>, vector<4x256xf32>, vector<5x256xf32> -> vector<5x256xf32>
      %c0_31 = arith.constant 0 : index
      %c0_32 = arith.constant 0 : index
      %46 = vector.load %arg8[%c0_31, %c0_32] : memref<5x1xf32, #tpu.memory_space<vmem>>, vector<5x1xf32>
      %47 = vector.broadcast %46 : vector<5x1xf32> to vector<5x256xf32>
      %48 = arith.addf %45, %47 : vector<5x256xf32>
      %49 = arith.truncf %48 : vector<5x256xf32> to vector<5x256xbf16>
      %c0_33 = arith.constant 0 : index
      %c0_34 = arith.constant 0 : index
      %50 = vector.load %arg12[%c0_33, %c0_34] : memref<5x256xbf16, #tpu.memory_space<vmem>>, vector<5x256xbf16>
      tpu.vector_store %arg12[%c0_33, %c0_34], %49 {strides = array<i32>} : memref<5x256xbf16, #tpu.memory_space<vmem>>, vector<5x256xbf16>,
    } else {
    }
    %c128_i32 = arith.constant 128 : i32
    %3 = arith.muli %arg1, %c128_i32 : i32
    %4 = tpu.assume_multiple %3, 128 : i32
    %c0 = arith.constant 0 : index
    %c0_1 = arith.constant 0 : index
    %5 = arith.index_cast %4 : i32 to index
    %6 = vector.load %arg2[%c0, %c0_1, %5] : memref<1x4x256xf32, #tpu.memory_space<vmem>>, vector<1x4x128xf32>
    %7 = vector.shape_cast %6 : vector<1x4x128xf32> to vector<4x128xf32>
    %c0_2 = arith.constant 0 : index
    %c0_3 = arith.constant 0 : index
    %8 = vector.load %arg3[%c0_2, %c0_3] : memref<1x4xf32, #tpu.memory_space<vmem>>, vector<1x4xf32>
    %cst = arith.constant dense<0.000000e+00> : vector<1x128xf32>
    %9 = tpu.matmul %8, %7, %cst {dimension_numbers = #tpu.dot_dimension_numbers<[1], [0], [0], [1], [0, 0, 1, 1], [], []>} : vector<1x4xf32>, vector<4x128xf32>, vector<1x128xf32> -> vector<1x128xf32>
    %c0_4 = arith.constant 0 : index
    %c0_5 = arith.constant 0 : index
    %10 = vector.load %arg4[%c0_4, %c0_5] : memref<1x1xf32, #tpu.memory_space<vmem>>, vector<1x1xf32>
    %11 = vector.broadcast %10 : vector<1x1xf32> to vector<1x128xf32>
    %12 = arith.addf %9, %11 : vector<1x128xf32>
    %c0_6 = arith.constant 0 : index
    %c0_7 = arith.constant 0 : index
    %13 = vector.load %arg11[%c0_6, %c0_7] : memref<256x1xbf16, #tpu.memory_space<vmem>>, vector<256x1xbf16>
    %14 = arith.truncf %12 : vector<1x128xf32> to vector<1x128xbf16>
    %cst_8 = arith.constant dense<0.000000e+00> : vector<256x128xf32>
    %15 = tpu.matmul %13, %14, %cst_8 {dimension_numbers = #tpu.dot_dimension_numbers<[1], [0], [0], [1], [0, 0, 1, 1], [], []>} : vector<256x1xbf16>, vector<1x128xbf16>, vector<256x128xf32> -> vector<256x128xf32>
    %cst_9 = arith.constant 0.000000e+00 : f32
    %16 = vector.broadcast %cst_9 : f32 to vector<256x128xf32>
    %17 = arith.maximumf %15, %16 : vector<256x128xf32>
    %18 = arith.truncf %17 : vector<256x128xf32> to vector<256x128xbf16>
    %c0_10 = arith.constant 0 : index
    %c0_11 = arith.constant 0 : index
    %19 = vector.load %arg12[%c0_10, %c0_11] : memref<5x256xbf16, #tpu.memory_space<vmem>>, vector<5x256xbf16>
    %cst_12 = arith.constant dense<0.000000e+00> : vector<5x128xf32>
    %20 = tpu.matmul %19, %18, %cst_12 {dimension_numbers = #tpu.dot_dimension_numbers<[1], [0], [0], [1], [0, 0, 1, 1], [], []>} : vector<5x256xbf16>, vector<256x128xbf16>, vector<5x128xf32> -> vector<5x128xf32>
    %21 = vector.extract_strided_slice %20 {offsets = [4, 0], sizes = [1, 128], strides = [1, 1]} : vector<5x128xf32> to vector<1x128xf32>
    %cst_13 = arith.constant 9.99999996E-13 : f32
    %22 = vector.broadcast %cst_13 : f32 to vector<1x128xf32>
    %23 = arith.maximumf %21, %22 : vector<1x128xf32>
    %24 = tpu.reciprocal %23 {approx = true} : vector<1x128xf32> -> vector<1x128xf32>
    %25 = vector.extract_strided_slice %20 {offsets = [0, 0], sizes = [4, 128], strides = [1, 1]} : vector<5x128xf32> to vector<4x128xf32>
    %26 = vector.broadcast %24 : vector<1x128xf32> to vector<4x128xf32>
    %27 = arith.mulf %25, %26 : vector<4x128xf32>
    %c0_14 = arith.constant 0 : index
    %28 = memref.load %arg9[%c0_14] : memref<1xf32, #tpu.memory_space<smem>>
    %29 = vector.broadcast %28 : f32 to vector<4x128xf32>
    %30 = arith.mulf %29, %27 : vector<4x128xf32>
    %31 = arith.addf %30, %7 : vector<4x128xf32>
    %c0_15 = arith.constant 0 : index
    %c0_16 = arith.constant 0 : index
    %c0_17 = arith.constant 0 : index
    %32 = vector.load %arg10[%c0_15, %c0_16, %c0_17] : memref<1x4x128xf32, #tpu.memory_space<vmem>>, vector<1x4x128xf32>
    %33 = vector.shape_cast %32 : vector<1x4x128xf32> to vector<4x128xf32>
    %34 = vector.shape_cast %31 : vector<4x128xf32> to vector<1x4x128xf32>
    tpu.vector_store %arg10[%c0_15, %c0_16, %c0_17], %34 {strides = array<i32>} : memref<1x4x128xf32, #tpu.memory_space<vmem>>, vector<1x4x128xf32>,
    return
  }
  func.func @transform_0(%arg0: i32, %arg1: i32) -> (i32, i32, i32) {
    %c0_i32 = arith.constant 0 : i32
    %c0_i32_0 = arith.constant 0 : i32
    %c0_i32_1 = arith.constant 0 : i32
    return %arg0, %c0_i32, %c0_i32_0 : i32, i32, i32
  }
  func.func @transform_1(%arg0: i32, %arg1: i32) -> (i32, i32) {
    %c0_i32 = arith.constant 0 : i32
    %c0_i32_0 = arith.constant 0 : i32
    %c0_i32_1 = arith.constant 0 : i32
    return %c0_i32, %c0_i32_0 : i32, i32
  }
  func.func @transform_2(%arg0: i32, %arg1: i32) -> (i32, i32) {
    %c0_i32 = arith.constant 0 : i32
    %c0_i32_0 = arith.constant 0 : i32
    %c0_i32_1 = arith.constant 0 : i32
    return %c0_i32, %c0_i32_0 : i32, i32
  }
  func.func @transform_3(%arg0: i32, %arg1: i32) -> (i32, i32) {
    %c0_i32 = arith.constant 0 : i32
    %c0_i32_0 = arith.constant 0 : i32
    %c0_i32_1 = arith.constant 0 : i32
    return %c0_i32, %c0_i32_0 : i32, i32
  }
  func.func @transform_4(%arg0: i32, %arg1: i32) -> (i32, i32) {
    %c0_i32 = arith.constant 0 : i32
    %c0_i32_0 = arith.constant 0 : i32
    %c0_i32_1 = arith.constant 0 : i32
    return %c0_i32, %c0_i32_0 : i32, i32
  }
  func.func @transform_5(%arg0: i32, %arg1: i32) -> (i32, i32) {
    %c0_i32 = arith.constant 0 : i32
    %c0_i32_0 = arith.constant 0 : i32
    %c0_i32_1 = arith.constant 0 : i32
    return %c0_i32, %c0_i32_0 : i32, i32
  }
  func.func @transform_6(%arg0: i32, %arg1: i32) -> (i32, i32) {
    %c0_i32 = arith.constant 0 : i32
    %c0_i32_0 = arith.constant 0 : i32
    %c0_i32_1 = arith.constant 0 : i32
    return %c0_i32, %c0_i32_0 : i32, i32
  }
  func.func @transform_7(%arg0: i32, %arg1: i32) -> i32 {
    %c0_i32 = arith.constant 0 : i32
    %c0_i32_0 = arith.constant 0 : i32
    return %c0_i32 : i32
  }
  func.func @transform_8(%arg0: i32, %arg1: i32) -> (i32, i32, i32) {
    %c0_i32 = arith.constant 0 : i32
    %c0_i32_0 = arith.constant 0 : i32
    return %arg0, %c0_i32, %arg1 : i32, i32, i32
  }
}

</mosaic_0001>

<llo_original>
// kernel: tpu_custom_call.1
$region0: #{tpu_custom_call.1}
  #allocation0 [shape = 'u32[]', space=smem, size = 0x4, offset = 0x4, fixed_abs, tag = 'smem constant byte address 0x4 - core index']
  #allocation1 [shape = 'u32[144,128]{1,0:T(1,128)}', space=vmem, size = 0x12000, scoped, tag = 'internal scratch']
  #allocation2 [shape = 'bf16[256,1]{1,0:T(16,128)(2,1)}', space=vmem, size = 0x10000, scoped, tag = 'scratch operand']
  #allocation3 [shape = 'bf16[5,256]{1,0:T(8,128)(2,1)}', space=vmem, size = 0x1000, scoped, tag = 'scratch operand']
  #allocation4 [shape = 'f32[1,1]{1,0:T(1,128)S(1)}', space=vmem, size = 0x200, scoped, tag = 'scoped memory for tpu_custom_call.1']
  #allocation5 [shape = 'f32[1,1]{1,0:T(1,128)S(1)}', space=vmem, size = 0x200, scoped, tag = 'scoped memory for tpu_custom_call.1']
  #allocation6 [shape = 'f32[1]{0:T(128)S(6)}', space=smem, size = 0x200, scoped, tag = 'scoped memory for tpu_custom_call.1']
  %s0 = inlined_call_operand.vmem [shape: f32[2,4,256], index: 0, kind: input, shape index: {}]
  %s1 = inlined_call_operand.vmem [shape: f32[1,4], index: 1, kind: input, shape index: {}]
  %s2 = inlined_call_operand.<no memory space> [shape: f32[1,1], index: 2, kind: input, shape index: {}]
  %s3 = inlined_call_operand.vmem [shape: f32[4,1], index: 3, kind: input, shape index: {}]
  %s4 = inlined_call_operand.<no memory space> [shape: f32[1,1], index: 4, kind: input, shape index: {}]
  %s5 = inlined_call_operand.vmem [shape: f32[5,4], index: 5, kind: input, shape index: {}]
  %s6 = inlined_call_operand.vmem [shape: f32[5,1], index: 6, kind: input, shape index: {}]
  %s7 = inlined_call_operand.<no memory space> [shape: f32[1], index: 7, kind: input, shape index: {}]
  %s8 = inlined_call_operand.hbm [shape: f32[2,4,256], index: 8, kind: output, shape index: {}]
  %s9 = sld [smem:[#allocation0]]
  $region69: #{tpu_custom_call.1} parent=0
    _
  %s11 = ssub.s32 1, %s9
  %s12 = scalar_select 0, %s11, %s9
  %v13 = vstv %s2
  %14 = vst [vmem:[#allocation4] sm:$0x1] %v13
  %v15 = vstv %s4
  %16 = vst [vmem:[#allocation5] sm:$0x1] %v15
  %17 = sst [smem:[#allocation6]] %s7
  $region1: #{tpu_custom_call.1} parent=0
    #allocation7 [shape = 'u8[4096]{0}', space=vmem, size = 0x1000, scoped, tag = 'output window, operand 0']
    #allocation8 [shape = 's32[2]{0}', space=sflag, size = 0x8, scoped, tag = 'scoped memory for tpu_custom_call.1']
    %18 = vsyncpa [#allocation8], 0
    %s19 = scalar_lea.sflag [#allocation8], 1
    %20 = vsyncpa %s19, 0
    loop: start=0, step=1, limit=6
    $region2: #{tpu_custom_call.1} parent=1 // loop_pre_header
      _
    $region3: #{tpu_custom_call.1} parent=1 // loop_header
      %s22 = sphi 0, %s26
      %p23 = scmp.ge.s32.totalorder %s22, 6
      %s29 = sphi 0, %s41
      %s30 = sphi 0, %s37
      %s31 = sphi 0, %s29
      %s32 = sphi 0, %s30
      %s33 = sphi 0, %s31
      %s34 = sphi 0, %s32
      %s44 = sphi 0, %s46
      %s47 = sphi 0, %s44
      %s48 = sphi 0, %s47
      %s64 = sphi 0, %s48
      %s68 = sphi 0, %s68
      %s70 = sphi 0, %s68
      %s71 = sphi 0, %s70
      %s85 = sphi 0, %s71
      %s89 = sphi 0, %s89
      %s91 = sphi 0, %s89
      %s92 = sphi 0, %s91
      %s106 = sphi 0, %s92
      %s110 = sphi 0, %s110
      %s112 = sphi 0, %s110
      %s113 = sphi 0, %s112
      %s127 = sphi 0, %s113
      %s131 = sphi 0, %s131
      %s133 = sphi 0, %s131
      %s134 = sphi 0, %s133
      %s148 = sphi 0, %s134
      %s152 = sphi 0, %s152
      %s154 = sphi 0, %s152
      %s155 = sphi 0, %s154
      %s169 = sphi 0, %s155
      %s173 = sphi 0, %s173
      %s175 = sphi 0, %s173
      %s176 = sphi 0, %s175
      %s190 = sphi 0, %s176
      %s194 = sphi 0, %s194
      %s196 = sphi 0, %s194
      %s197 = sphi 0, %s196
      %s211 = sphi 0, %s197
      %s219 = sphi 0, %s221
      %s222 = sphi 0, %s219
      %s223 = sphi 0, %s222
      %s239 = sphi 0, %s223
    $region4: #{tpu_custom_call.1} parent=1 // loop_header_branch
      %25 = sbr.rel (%p23) target = $region8
    $region5: #{tpu_custom_call.1} parent=1 // loop_body
      %s27 = ssub.s32 %s22, 1
      %s28 = ssub.s32 %s22, 2
      %s35 = sadd.s32 1, %s30
      %p36 = scmp.ge.s32.totalorder %s35, 2
      %s37 = scalar_select %p36, 0, %s35
      %s38 = sadd.s32 1, %s29
      %s39 = scalar_select %p36, %s38, %s29
      %p40 = scmp.ge.s32.totalorder %s39, 2
      %s41 = scalar_select %p40, 0, %s39
      %s42 = ssub.s32 %s29, %s41
      %p43 = scmp.eq.s32.totalorder %s42, 0
      %s45 = sadd.s32 %s44, 1
      %s46 = scalar_select %p43, %s44, %s45
      %p49 = pneg %p43
      %p50 = scmp.eq.s32.totalorder %s22, 3
      %p51 = por %p49, %p50
      %p52 = scmp.ne.s32.totalorder %s44, %s47
      %p53 = scmp.eq.s32.totalorder %s22, 0
      %p54 = por %p52, %p53
      %p55 = scmp.ne.s32.totalorder %s44, %s47
      %p56 = scmp.eq.s32.totalorder %s27, 3
      %p57 = por %p55, %p56
      %p58 = scmp.ne.s32.totalorder %s47, %s48
      %p59 = scmp.eq.s32.totalorder %s27, 0
      %p60 = por %p58, %p59
      %p61 = scmp.ne.s32.totalorder %s47, %s48
      %p62 = scmp.eq.s32.totalorder %s28, 3
      %p63 = por %p61, %p62
      %p65 = scmp.ne.s32.totalorder %s48, %s64
      %p66 = scmp.eq.s32.totalorder %s28, 0
      %p67 = por %p65, %p66
      %s69 = sadd.s32 %s68, 1
      %p72 = scmp.eq.s32.totalorder %s22, 3
      %p73 = scmp.ne.s32.totalorder %s68, %s70
      %p74 = scmp.eq.s32.totalorder %s22, 0
      %p75 = por %p73, %p74
      %p76 = scmp.ne.s32.totalorder %s68, %s70
      %p77 = scmp.eq.s32.totalorder %s27, 3
      %p78 = por %p76, %p77
      %p79 = scmp.ne.s32.totalorder %s70, %s71
      %p80 = scmp.eq.s32.totalorder %s27, 0
      %p81 = por %p79, %p80
      %p82 = scmp.ne.s32.totalorder %s70, %s71
      %p83 = scmp.eq.s32.totalorder %s28, 3
      %p84 = por %p82, %p83
      %p86 = scmp.ne.s32.totalorder %s71, %s85
      %p87 = scmp.eq.s32.totalorder %s28, 0
      %p88 = por %p86, %p87
      %s90 = sadd.s32 %s89, 1
      %p93 = scmp.eq.s32.totalorder %s22, 3
      %p94 = scmp.ne.s32.totalorder %s89, %s91
      %p95 = scmp.eq.s32.totalorder %s22, 0
      %p96 = por %p94, %p95
      %p97 = scmp.ne.s32.totalorder %s89, %s91
      %p98 = scmp.eq.s32.totalorder %s27, 3
      %p99 = por %p97, %p98
      %p100 = scmp.ne.s32.totalorder %s91, %s92
      %p101 = scmp.eq.s32.totalorder %s27, 0
      %p102 = por %p100, %p101
      %p103 = scmp.ne.s32.totalorder %s91, %s92
      %p104 = scmp.eq.s32.totalorder %s28, 3
      %p105 = por %p103, %p104
      %p107 = scmp.ne.s32.totalorder %s92, %s106
      %p108 = scmp.eq.s32.totalorder %s28, 0
      %p109 = por %p107, %p108
      %s111 = sadd.s32 %s110, 1
      %p114 = scmp.eq.s32.totalorder %s22, 3
      %p115 = scmp.ne.s32.totalorder %s110, %s112
      %p116 = scmp.eq.s32.totalorder %s22, 0
      %p117 = por %p115, %p116
      %p118 = scmp.ne.s32.totalorder %s110, %s112
      %p119 = scmp.eq.s32.totalorder %s27, 3
      %p120 = por %p118, %p119
      %p121 = scmp.ne.s32.totalorder %s112, %s113
      %p122 = scmp.eq.s32.totalorder %s27, 0
      %p123 = por %p121, %p122
      %p124 = scmp.ne.s32.totalorder %s112, %s113
      %p125 = scmp.eq.s32.totalorder %s28, 3
      %p126 = por %p124, %p125
      %p128 = scmp.ne.s32.totalorder %s113, %s127
      %p129 = scmp.eq.s32.totalorder %s28, 0
      %p130 = por %p128, %p129
      %s132 = sadd.s32 %s131, 1
      %p135 = scmp.eq.s32.totalorder %s22, 3
      %p136 = scmp.ne.s32.totalorder %s131, %s133
      %p137 = scmp.eq.s32.totalorder %s22, 0
      %p138 = por %p136, %p137
      %p139 = scmp.ne.s32.totalorder %s131, %s133
      %p140 = scmp.eq.s32.totalorder %s27, 3
      %p141 = por %p139, %p140
      %p142 = scmp.ne.s32.totalorder %s133, %s134
      %p143 = scmp.eq.s32.totalorder %s27, 0
      %p144 = por %p142, %p143
      %p145 = scmp.ne.s32.totalorder %s133, %s134
      %p146 = scmp.eq.s32.totalorder %s28, 3
      %p147 = por %p145, %p146
      %p149 = scmp.ne.s32.totalorder %s134, %s148
      %p150 = scmp.eq.s32.totalorder %s28, 0
      %p151 = por %p149, %p150
      %s153 = sadd.s32 %s152, 1
      %p156 = scmp.eq.s32.totalorder %s22, 3
      %p157 = scmp.ne.s32.totalorder %s152, %s154
      %p158 = scmp.eq.s32.totalorder %s22, 0
      %p159 = por %p157, %p158
      %p160 = scmp.ne.s32.totalorder %s152, %s154
      %p161 = scmp.eq.s32.totalorder %s27, 3
      %p162 = por %p160, %p161
      %p163 = scmp.ne.s32.totalorder %s154, %s155
      %p164 = scmp.eq.s32.totalorder %s27, 0
      %p165 = por %p163, %p164
      %p166 = scmp.ne.s32.totalorder %s154, %s155
      %p167 = scmp.eq.s32.totalorder %s28, 3
      %p168 = por %p166, %p167
      %p170 = scmp.ne.s32.totalorder %s155, %s169
      %p171 = scmp.eq.s32.totalorder %s28, 0
      %p172 = por %p170, %p171
      %s174 = sadd.s32 %s173, 1
      %p177 = scmp.eq.s32.totalorder %s22, 3
      %p178 = scmp.ne.s32.totalorder %s173, %s175
      %p179 = scmp.eq.s32.totalorder %s22, 0
      %p180 = por %p178, %p179
      %p181 = scmp.ne.s32.totalorder %s173, %s175
      %p182 = scmp.eq.s32.totalorder %s27, 3
      %p183 = por %p181, %p182
      %p184 = scmp.ne.s32.totalorder %s175, %s176
      %p185 = scmp.eq.s32.totalorder %s27, 0
      %p186 = por %p184, %p185
      %p187 = scmp.ne.s32.totalorder %s175, %s176
      %p188 = scmp.eq.s32.totalorder %s28, 3
      %p189 = por %p187, %p188
      %p191 = scmp.ne.s32.totalorder %s176, %s190
      %p192 = scmp.eq.s32.totalorder %s28, 0
      %p193 = por %p191, %p192
      %s195 = sadd.s32 %s194, 1
      %p198 = scmp.eq.s32.totalorder %s22, 3
      %p199 = scmp.ne.s32.totalorder %s194, %s196
      %p200 = scmp.eq.s32.totalorder %s22, 0
      %p201 = por %p199, %p200
      %p202 = scmp.ne.s32.totalorder %s194, %s196
      %p203 = scmp.eq.s32.totalorder %s27, 3
      %p204 = por %p202, %p203
      %p205 = scmp.ne.s32.totalorder %s196, %s197
      %p206 = scmp.eq.s32.totalorder %s27, 0
      %p207 = por %p205, %p206
      %p208 = scmp.ne.s32.totalorder %s196, %s197
      %p209 = scmp.eq.s32.totalorder %s28, 3
      %p210 = por %p208, %p209
      %p212 = scmp.ne.s32.totalorder %s197, %s211
      %p213 = scmp.eq.s32.totalorder %s28, 0
      %p214 = por %p212, %p213
      %s215 = ssub.s32 %s29, %s41
      %s216 = ssub.s32 %s30, %s37
      %s217 = sor.u32 %s215, %s216
      %p218 = scmp.eq.s32.totalorder %s217, 0
      %s220 = sadd.s32 %s219, 1
      %s221 = scalar_select %p218, %s219, %s220
      %p224 = pneg %p218
      %p225 = scmp.eq.s32.totalorder %s22, 3
      %p226 = por %p224, %p225
      %p227 = scmp.ne.s32.totalorder %s219, %s222
      %p228 = scmp.eq.s32.totalorder %s22, 0
      %p229 = por %p227, %p228
      %p230 = scmp.ne.s32.totalorder %s219, %s222
      %p231 = scmp.eq.s32.totalorder %s27, 3
      %p232 = por %p230, %p231
      %p233 = scmp.ne.s32.totalorder %s222, %s223
      %p234 = scmp.eq.s32.totalorder %s27, 0
      %p235 = por %p233, %p234
      %p236 = scmp.ne.s32.totalorder %s222, %s223
      %p237 = scmp.eq.s32.totalorder %s28, 3
      %p238 = por %p236, %p237
      %p240 = scmp.ne.s32.totalorder %s223, %s239
      %p241 = scmp.eq.s32.totalorder %s28, 0
      %p242 = por %p240, %p241
      %p243 = scmp.le.s32.totalorder 1, %s22
      %p244 = scmp.lt.s32.totalorder %s22, 5
      %p245 = pnand %p243, %p244
      %p246 = pneg %p245
      // Predicated region
      $region9: #{tpu_custom_call.1} parent=5 // pred_check
        _
      $region10: #{tpu_custom_call.1} parent=5 // pred_check_branch
        %248 = sbr.rel (%p245) target = $region12
      $region11: #{tpu_custom_call.1} parent=5 // pred_region
        %s249 = ssub.s32 %s22, 1
        // Predicated region
        $region13: #{tpu_custom_call.1} parent=11 // pred_check
          %p250 = pneg %p81
        $region14: #{tpu_custom_call.1} parent=11 // pred_check_branch
          %252 = sbr.rel (%p250) target = $region16
        $region15: #{tpu_custom_call.1} parent=11 // pred_region
          _
        $region16: #{tpu_custom_call.1} parent=11 // pred_fallthru
          _
        // Predicated region
        $region17: #{tpu_custom_call.1} parent=11 // pred_check
          %p253 = pneg %p102
        $region18: #{tpu_custom_call.1} parent=11 // pred_check_branch
          %255 = sbr.rel (%p253) target = $region20
        $region19: #{tpu_custom_call.1} parent=11 // pred_region
          _
        $region20: #{tpu_custom_call.1} parent=11 // pred_fallthru
          _
        // Predicated region
        $region21: #{tpu_custom_call.1} parent=11 // pred_check
          %p256 = pneg %p123
        $region22: #{tpu_custom_call.1} parent=11 // pred_check_branch
          %258 = sbr.rel (%p256) target = $region24
        $region23: #{tpu_custom_call.1} parent=11 // pred_region
          _
        $region24: #{tpu_custom_call.1} parent=11 // pred_fallthru
          _
        // Predicated region
        $region25: #{tpu_custom_call.1} parent=11 // pred_check
          %p259 = pneg %p144
        $region26: #{tpu_custom_call.1} parent=11 // pred_check_branch
          %261 = sbr.rel (%p259) target = $region28
        $region27: #{tpu_custom_call.1} parent=11 // pred_region
          _
        $region28: #{tpu_custom_call.1} parent=11 // pred_fallthru
          _
        // Predicated region
        $region29: #{tpu_custom_call.1} parent=11 // pred_check
          %p262 = pneg %p165
        $region30: #{tpu_custom_call.1} parent=11 // pred_check_branch
          %264 = sbr.rel (%p262) target = $region32
        $region31: #{tpu_custom_call.1} parent=11 // pred_region
          _
        $region32: #{tpu_custom_call.1} parent=11 // pred_fallthru
          _
        // Predicated region
        $region33: #{tpu_custom_call.1} parent=11 // pred_check
          %p265 = pneg %p186
        $region34: #{tpu_custom_call.1} parent=11 // pred_check_branch
          %267 = sbr.rel (%p265) target = $region36
        $region35: #{tpu_custom_call.1} parent=11 // pred_region
          _
        $region36: #{tpu_custom_call.1} parent=11 // pred_fallthru
          _
        // Predicated region
        $region37: #{tpu_custom_call.1} parent=11 // pred_check
          %p268 = pneg %p207
        $region38: #{tpu_custom_call.1} parent=11 // pred_check_branch
          %270 = sbr.rel (%p268) target = $region40
        $region39: #{tpu_custom_call.1} parent=11 // pred_region
          _
        $region40: #{tpu_custom_call.1} parent=11 // pred_fallthru
          _
      $region12: #{tpu_custom_call.1} parent=5 // pred_fallthru
        _
      %p271 = scmp.lt.s32.totalorder %s22, 4
      // Predicated region
      $region41: #{tpu_custom_call.1} parent=5 // pred_check
        %p272 = pneg %p271
      $region42: #{tpu_custom_call.1} parent=5 // pred_check_branch
        %274 = sbr.rel (%p272) target = $region44
      $region43: #{tpu_custom_call.1} parent=5 // pred_region
        // Predicated region
        $region45: #{tpu_custom_call.1} parent=43 // pred_check
          %p275 = pneg %p54
        $region46: #{tpu_custom_call.1} parent=43 // pred_check_branch
          %277 = sbr.rel (%p275) target = $region48
        $region47: #{tpu_custom_call.1} parent=43 // pred_region
          %p278 = scmp.lt.s32.totalorder %s29, 1
          %s279 = scalar_select %p278, %s29, 1
          %s280 = smul.addr %s279, 2
          %s281 = smul.addr %s280, 4
          %s282 = scalar_lea.vmem %s0, %s281
        $region48: #{tpu_custom_call.1} parent=43 // pred_fallthru
          _
      $region44: #{tpu_custom_call.1} parent=5 // pred_fallthru
        _
      %p283 = scmp.le.s32.totalorder 1, %s22
      %p284 = scmp.lt.s32.totalorder %s22, 5
      %p285 = pnand %p283, %p284
      %p286 = pneg %p285
      // Predicated region
      $region49: #{tpu_custom_call.1} parent=5 // pred_check
        _
      $region50: #{tpu_custom_call.1} parent=5 // pred_check_branch
        %288 = sbr.rel (%p285) target = $region52
      $region51: #{tpu_custom_call.1} parent=5 // pred_region
        %s289 = ssub.s32 %s22, 1
        %p290 = scmp.lt.s32.totalorder %s31, 1
        %s291 = scalar_select %p290, %s31, 1
        %s292 = smul.addr %s291, 2
        %s293 = smul.addr %s292, 4
        %s294 = scalar_lea.vmem %s0, %s293
        %p295 = pneg %p60
        %p296 = pneg %p57
        %p297 = pneg %p81
        %p298 = pneg %p78
        %p299 = pneg %p102
        %p300 = pneg %p99
        %p301 = pneg %p123
        %p302 = pneg %p120
        %p303 = pneg %p144
        %p304 = pneg %p141
        %p305 = pneg %p165
        %p306 = pneg %p162
        %p307 = pneg %p186
        %p308 = pneg %p183
        %p309 = pneg %p207
        %p310 = pneg %p204
        %p311 = pneg %p235
        %p312 = pneg %p232
        %s313 = sand.u32 %s222, 1
        %s314 = scalar_lea.sflag [#allocation8], %s313
        %s315 = sand.u32 %s222, 1
        %s316 = smul.addr %s315, 4
        %s317 = scalar_lea.vmem [#allocation7], %s316
        %p318 = scmp.lt.s32.totalorder %s31, 1
        %s319 = scalar_select %p318, %s31, 1
        %s320 = smul.addr %s319, 2
        %s321 = smul.addr %s320, 4
        %s322 = scalar_lea.vmem %s0, %s321
        %p324 = scmp.eq.s32.totalorder %s32, 0
        // Predicated region
        $region53: #{tpu_custom_call.1} parent=51 // pred_check
          %p325 = pneg %p324
        $region54: #{tpu_custom_call.1} parent=51 // pred_check_branch
          %327 = sbr.rel (%p325) target = $region56
        $region55: #{tpu_custom_call.1} parent=51 // pred_region
          %v328 = vld [vmem:[%s322] sm:$0xff]
          %v329 = vld [vmem:[%s3] sm:$0xf]
          %v330 = vld [vmem:[#allocation5] sm:$0x1]
          %v332 = vlaneseq
          %v333 = vshrl.u32 %v332, 7
          %v334 = vsub.s32 0, %v333
          %v335 = vrot.slane %v330, %v334
          %v338 = vcombine.high %v328, %v328
          %340 = vxpose.xlu0.b32.start [1/16] %v328, 128
          %341 = vxpose.xlu0.b32.cont [2/16] 0.0, 128
          %342 = vxpose.xlu0.b32.cont [3/16] 0.0, 128
          %343 = vxpose.xlu0.b32.cont [4/16] 0.0, 128
          %344 = vxpose.xlu0.b32.cont [5/16] 0.0, 128
          %345 = vxpose.xlu0.b32.cont [6/16] 0.0, 128
          %346 = vxpose.xlu0.b32.cont [7/16] 0.0, 128
          %347 = vxpose.xlu0.b32.cont [8/16] 0.0, 128
          %348 = vxpose.xlu0.b32.cont [9/16] 0.0, 128
          %349 = vxpose.xlu0.b32.cont [10/16] 0.0, 128
          %350 = vxpose.xlu0.b32.cont [11/16] 0.0, 128
          %351 = vxpose.xlu0.b32.cont [12/16] 0.0, 128
          %352 = vxpose.xlu0.b32.cont [13/16] 0.0, 128
          %353 = vxpose.xlu0.b32.cont [14/16] 0.0, 128
          %354 = vxpose.xlu0.b32.cont [15/16] 0.0, 128
          %355 = vxpose.xlu0.b32.end [16/16] 0.0, 128
          %v356 = vpop.trf.xlu0
          %v357 = vpop.trf.xlu0
          %v358 = vpop.trf.xlu0
          %v359 = vpop.trf.xlu0
          %v360 = vpop.trf.xlu0
          %v361 = vpop.trf.xlu0
          %v362 = vpop.trf.xlu0
          %v363 = vpop.trf.xlu0
          %v364 = vpop.trf.xlu0
          %v365 = vpop.trf.xlu0
          %v366 = vpop.trf.xlu0
          %v367 = vpop.trf.xlu0
          %v368 = vpop.trf.xlu0
          %v369 = vpop.trf.xlu0
          %v370 = vpop.trf.xlu0
          %v371 = vpop.trf.xlu0
          %372 = vxpose.xlu0.b32.start [1/16] %v338, 128
          %373 = vxpose.xlu0.b32.cont [2/16] 0.0, 128
          %374 = vxpose.xlu0.b32.cont [3/16] 0.0, 128
          %375 = vxpose.xlu0.b32.cont [4/16] 0.0, 128
          %376 = vxpose.xlu0.b32.cont [5/16] 0.0, 128
          %377 = vxpose.xlu0.b32.cont [6/16] 0.0, 128
          %378 = vxpose.xlu0.b32.cont [7/16] 0.0, 128
          %379 = vxpose.xlu0.b32.cont [8/16] 0.0, 128
          %380 = vxpose.xlu0.b32.cont [9/16] 0.0, 128
          %381 = vxpose.xlu0.b32.cont [10/16] 0.0, 128
          %382 = vxpose.xlu0.b32.cont [11/16] 0.0, 128
          %383 = vxpose.xlu0.b32.cont [12/16] 0.0, 128
          %384 = vxpose.xlu0.b32.cont [13/16] 0.0, 128
          %385 = vxpose.xlu0.b32.cont [14/16] 0.0, 128
          %386 = vxpose.xlu0.b32.cont [15/16] 0.0, 128
          %387 = vxpose.xlu0.b32.end [16/16] 0.0, 128
          %v388 = vpop.trf.xlu0
          %v389 = vpop.trf.xlu0
          %v390 = vpop.trf.xlu0
          %v391 = vpop.trf.xlu0
          %v392 = vpop.trf.xlu0
          %v393 = vpop.trf.xlu0
          %v394 = vpop.trf.xlu0
          %v395 = vpop.trf.xlu0
          %v396 = vpop.trf.xlu0
          %v397 = vpop.trf.xlu0
          %v398 = vpop.trf.xlu0
          %v399 = vpop.trf.xlu0
          %v400 = vpop.trf.xlu0
          %v401 = vpop.trf.xlu0
          %v402 = vpop.trf.xlu0
          %v403 = vpop.trf.xlu0
          %vm404 = vcmask 31744
          %v406 = vsel %vm404, %v356, 0
          %v409 = vsel %vm404, %v357, 0
          %v412 = vsel %vm404, %v358, 0
          %v415 = vsel %vm404, %v359, 0
          %v418 = vsel %vm404, %v360, 0
          %v421 = vsel %vm404, %v361, 0
          %v424 = vsel %vm404, %v362, 0
          %v427 = vsel %vm404, %v363, 0
          %v430 = vsel %vm404, %v364, 0
          %v433 = vsel %vm404, %v365, 0
          %v436 = vsel %vm404, %v366, 0
          %v439 = vsel %vm404, %v367, 0
          %v442 = vsel %vm404, %v368, 0
          %v445 = vsel %vm404, %v369, 0
          %v448 = vsel %vm404, %v370, 0
          %v451 = vsel %vm404, %v371, 0
          %v454 = vsel %vm404, %v388, 0
          %v457 = vsel %vm404, %v389, 0
          %v460 = vsel %vm404, %v390, 0
          %v463 = vsel %vm404, %v391, 0
          %v466 = vsel %vm404, %v392, 0
          %v469 = vsel %vm404, %v393, 0
          %v472 = vsel %vm404, %v394, 0
          %v475 = vsel %vm404, %v395, 0
          %v478 = vsel %vm404, %v396, 0
          %v481 = vsel %vm404, %v397, 0
          %v484 = vsel %vm404, %v398, 0
          %v487 = vsel %vm404, %v399, 0
          %v490 = vsel %vm404, %v400, 0
          %v493 = vsel %vm404, %v401, 0
          %v496 = vsel %vm404, %v402, 0
          %v499 = vsel %vm404, %v403, 0
          %vm501 = vcmask 1043456
          %v503 = vsel %vm501, %v329, 0
          %505 = vmatprep.subr.mxu0 0.0
          %506 = vmatpush1.msra.mxu0 %v503
          %507 = vmatprep.subr.mxu0 0.0
          %508 = vmatpush1.msra.mxu0 0.0
          %509 = vmatprep.subr.mxu0 0.0
          %510 = vmatpush1.msra.mxu0 0.0
          %511 = vmatprep.subr.mxu0 0.0
          %512 = vmatpush1.msra.mxu0 0.0
          %513 = vmatprep.subr.mxu0 0.0
          %514 = vmatpush1.msra.mxu0 0.0
          %515 = vmatprep.subr.mxu0 0.0
          %516 = vmatpush1.msra.mxu0 0.0
          %517 = vmatprep.subr.mxu0 0.0
          %518 = vmatpush1.msra.mxu0 0.0
          %519 = vmatprep.subr.mxu0 0.0
          %520 = vmatpush1.msra.mxu0 0.0
          %521 = vmatprep.subr.mxu0 0.0
          %522 = vmatpush1.msra.mxu0 0.0
          %523 = vmatprep.subr.mxu0 0.0
          %524 = vmatpush1.msra.mxu0 0.0
          %525 = vmatprep.subr.mxu0 0.0
          %526 = vmatpush1.msra.mxu0 0.0
          %527 = vmatprep.subr.mxu0 0.0
          %528 = vmatpush1.msra.mxu0 0.0
          %529 = vmatprep.subr.mxu0 0.0
          %530 = vmatpush1.msra.mxu0 0.0
          %531 = vmatprep.subr.mxu0 0.0
          %532 = vmatpush1.msra.mxu0 0.0
          %533 = vmatprep.subr.mxu0 0.0
          %534 = vmatpush1.msra.mxu0 0.0
          %535 = vmatprep.subr.mxu0 0.0
          %536 = vmatpush1.msra.mxu0 0.0
          %537 = vmatprep.subr.mxu0 0.0
          %538 = vmatpush1.msra.mxu0 0.0
          %539 = vmatprep.subr.mxu0 0.0
          %540 = vmatpush1.msra.mxu0 0.0
          %541 = vmatprep.subr.mxu0 0.0
          %542 = vmatpush1.msra.mxu0 0.0
          %543 = vmatprep.subr.mxu0 0.0
          %544 = vmatpush1.msra.mxu0 0.0
          %545 = vmatprep.subr.mxu0 0.0
          %546 = vmatpush1.msra.mxu0 0.0
          %547 = vmatprep.subr.mxu0 0.0
          %548 = vmatpush1.msra.mxu0 0.0
          %549 = vmatprep.subr.mxu0 0.0
          %550 = vmatpush1.msra.mxu0 0.0
          %551 = vmatprep.subr.mxu0 0.0
          %552 = vmatpush1.msra.mxu0 0.0
          %553 = vmatprep.subr.mxu0 0.0
          %554 = vmatpush1.msra.mxu0 0.0
          %555 = vmatprep.subr.mxu0 0.0
          %556 = vmatpush1.msra.mxu0 0.0
          %557 = vmatprep.subr.mxu0 0.0
          %558 = vmatpush1.msra.mxu0 0.0
          %559 = vmatprep.subr.mxu0 0.0
          %560 = vmatpush1.msra.mxu0 0.0
          %561 = vmatprep.subr.mxu0 0.0
          %562 = vmatpush1.msra.mxu0 0.0
          %563 = vmatprep.subr.mxu0 0.0
          %564 = vmatpush1.msra.mxu0 0.0
          %565 = vmatprep.subr.mxu0 0.0
          %566 = vmatpush1.msra.mxu0 0.0
          %567 = vmatprep.subr.mxu0 0.0
          %568 = vmatpush1.msra.mxu0 0.0
          %569 = vmatprep.mubr.f32.mxu0 0.0
          %570 = vmatmul.mubr.f32.gmra.mrb[0].mxu0 %v406
          %v571 = vpop.f32.mrb[0].mxu0
          %v572 = vadd.f32 %v335, %v571
          %v573 = vpop.f32.mrb[0].mxu0
          %574 = vmatprep.mubr.f32.mxu0 0.0
          %575 = vmatmul.mubr.f32.gmra.mrb[0].mxu0 %v409
          %v576 = vpop.f32.mrb[0].mxu0
          %v577 = vadd.f32 %v335, %v576
          %v578 = vpop.f32.mrb[0].mxu0
          %579 = vmatprep.mubr.f32.mxu0 0.0
          %580 = vmatmul.mubr.f32.gmra.mrb[0].mxu0 %v412
          %v581 = vpop.f32.mrb[0].mxu0
          %v582 = vadd.f32 %v335, %v581
          %v583 = vpop.f32.mrb[0].mxu0
          %584 = vmatprep.mubr.f32.mxu0 0.0
          %585 = vmatmul.mubr.f32.gmra.mrb[0].mxu0 %v415
          %v586 = vpop.f32.mrb[0].mxu0
          %v587 = vadd.f32 %v335, %v586
          %v588 = vpop.f32.mrb[0].mxu0
          %589 = vmatprep.mubr.f32.mxu0 0.0
          %590 = vmatmul.mubr.f32.gmra.mrb[0].mxu0 %v418
          %v591 = vpop.f32.mrb[0].mxu0
          %v592 = vadd.f32 %v335, %v591
          %v593 = vpop.f32.mrb[0].mxu0
          %594 = vmatprep.mubr.f32.mxu0 0.0
          %595 = vmatmul.mubr.f32.gmra.mrb[0].mxu0 %v421
          %v596 = vpop.f32.mrb[0].mxu0
          %v597 = vadd.f32 %v335, %v596
          %v598 = vpop.f32.mrb[0].mxu0
          %599 = vmatprep.mubr.f32.mxu0 0.0
          %600 = vmatmul.mubr.f32.gmra.mrb[0].mxu0 %v424
          %v601 = vpop.f32.mrb[0].mxu0
          %v602 = vadd.f32 %v335, %v601
          %v603 = vpop.f32.mrb[0].mxu0
          %604 = vmatprep.mubr.f32.mxu0 0.0
          %605 = vmatmul.mubr.f32.gmra.mrb[0].mxu0 %v427
          %v606 = vpop.f32.mrb[0].mxu0
          %v607 = vadd.f32 %v335, %v606
          %v608 = vpop.f32.mrb[0].mxu0
          %609 = vmatprep.mubr.f32.mxu0 0.0
          %610 = vmatmul.mubr.f32.gmra.mrb[0].mxu0 %v430
          %v611 = vpop.f32.mrb[0].mxu0
          %v612 = vadd.f32 %v335, %v611
          %v613 = vpop.f32.mrb[0].mxu0
          %614 = vmatprep.mubr.f32.mxu0 0.0
          %615 = vmatmul.mubr.f32.gmra.mrb[0].mxu0 %v433
          %v616 = vpop.f32.mrb[0].mxu0
          %v617 = vadd.f32 %v335, %v616
          %v618 = vpop.f32.mrb[0].mxu0
          %619 = vmatprep.mubr.f32.mxu0 0.0
          %620 = vmatmul.mubr.f32.gmra.mrb[0].mxu0 %v436
          %v621 = vpop.f32.mrb[0].mxu0
          %v622 = vadd.f32 %v335, %v621
          %v623 = vpop.f32.mrb[0].mxu0
          %624 = vmatprep.mubr.f32.mxu0 0.0
          %625 = vmatmul.mubr.f32.gmra.mrb[0].mxu0 %v439
          %v626 = vpop.f32.mrb[0].mxu0
          %v627 = vadd.f32 %v335, %v626
          %v628 = vpop.f32.mrb[0].mxu0
          %629 = vmatprep.mubr.f32.mxu0 0.0
          %630 = vmatmul.mubr.f32.gmra.mrb[0].mxu0 %v442
          %v631 = vpop.f32.mrb[0].mxu0
          %v632 = vadd.f32 %v335, %v631
          %v633 = vpop.f32.mrb[0].mxu0
          %634 = vmatprep.mubr.f32.mxu0 0.0
          %635 = vmatmul.mubr.f32.gmra.mrb[0].mxu0 %v445
          %v636 = vpop.f32.mrb[0].mxu0
          %v637 = vadd.f32 %v335, %v636
          %v638 = vpop.f32.mrb[0].mxu0
          %639 = vmatprep.mubr.f32.mxu0 0.0
          %640 = vmatmul.mubr.f32.gmra.mrb[0].mxu0 %v448
          %v641 = vpop.f32.mrb[0].mxu0
          %v642 = vadd.f32 %v335, %v641
          %v643 = vpop.f32.mrb[0].mxu0
          %644 = vmatprep.mubr.f32.mxu0 0.0
          %645 = vmatmul.mubr.f32.gmra.mrb[0].mxu0 %v451
          %v646 = vpop.f32.mrb[0].mxu0
          %v647 = vadd.f32 %v335, %v646
          %v648 = vpop.f32.mrb[0].mxu0
          %649 = vmatprep.mubr.f32.mxu0 0.0
          %650 = vmatmul.mubr.f32.gmra.mrb[0].mxu0 %v454
          %v651 = vpop.f32.mrb[0].mxu0
          %v652 = vadd.f32 %v335, %v651
          %v653 = vpop.f32.mrb[0].mxu0
          %654 = vmatprep.mubr.f32.mxu0 0.0
          %655 = vmatmul.mubr.f32.gmra.mrb[0].mxu0 %v457
          %v656 = vpop.f32.mrb[0].mxu0
          %v657 = vadd.f32 %v335, %v656
          %v658 = vpop.f32.mrb[0].mxu0
          %659 = vmatprep.mubr.f32.mxu0 0.0
          %660 = vmatmul.mubr.f32.gmra.mrb[0].mxu0 %v460
          %v661 = vpop.f32.mrb[0].mxu0
          %v662 = vadd.f32 %v335, %v661
          %v663 = vpop.f32.mrb[0].mxu0
          %664 = vmatprep.mubr.f32.mxu0 0.0
          %665 = vmatmul.mubr.f32.gmra.mrb[0].mxu0 %v463
          %v666 = vpop.f32.mrb[0].mxu0
          %v667 = vadd.f32 %v335, %v666
          %v668 = vpop.f32.mrb[0].mxu0
          %669 = vmatprep.mubr.f32.mxu0 0.0
          %670 = vmatmul.mubr.f32.gmra.mrb[0].mxu0 %v466
          %v671 = vpop.f32.mrb[0].mxu0
          %v672 = vadd.f32 %v335, %v671
          %v673 = vpop.f32.mrb[0].mxu0
          %674 = vmatprep.mubr.f32.mxu0 0.0
          %675 = vmatmul.mubr.f32.gmra.mrb[0].mxu0 %v469
          %v676 = vpop.f32.mrb[0].mxu0
          %v677 = vadd.f32 %v335, %v676
          %v678 = vpop.f32.mrb[0].mxu0
          %679 = vmatprep.mubr.f32.mxu0 0.0
          %680 = vmatmul.mubr.f32.gmra.mrb[0].mxu0 %v472
          %v681 = vpop.f32.mrb[0].mxu0
          %v682 = vadd.f32 %v335, %v681
          %v683 = vpop.f32.mrb[0].mxu0
          %684 = vmatprep.mubr.f32.mxu0 0.0
          %685 = vmatmul.mubr.f32.gmra.mrb[0].mxu0 %v475
          %v686 = vpop.f32.mrb[0].mxu0
          %v687 = vadd.f32 %v335, %v686
          %v688 = vpop.f32.mrb[0].mxu0
          %689 = vmatprep.mubr.f32.mxu0 0.0
          %690 = vmatmul.mubr.f32.gmra.mrb[0].mxu0 %v478
          %v691 = vpop.f32.mrb[0].mxu0
          %v692 = vadd.f32 %v335, %v691
          %v693 = vpop.f32.mrb[0].mxu0
          %694 = vmatprep.mubr.f32.mxu0 0.0
          %695 = vmatmul.mubr.f32.gmra.mrb[0].mxu0 %v481
          %v696 = vpop.f32.mrb[0].mxu0
          %v697 = vadd.f32 %v335, %v696
          %v698 = vpop.f32.mrb[0].mxu0
          %699 = vmatprep.mubr.f32.mxu0 0.0
          %700 = vmatmul.mubr.f32.gmra.mrb[0].mxu0 %v484
          %v701 = vpop.f32.mrb[0].mxu0
          %v702 = vadd.f32 %v335, %v701
          %v703 = vpop.f32.mrb[0].mxu0
          %704 = vmatprep.mubr.f32.mxu0 0.0
          %705 = vmatmul.mubr.f32.gmra.mrb[0].mxu0 %v487
          %v706 = vpop.f32.mrb[0].mxu0
          %v707 = vadd.f32 %v335, %v706
          %v708 = vpop.f32.mrb[0].mxu0
          %709 = vmatprep.mubr.f32.mxu0 0.0
          %710 = vmatmul.mubr.f32.gmra.mrb[0].mxu0 %v490
          %v711 = vpop.f32.mrb[0].mxu0
          %v712 = vadd.f32 %v335, %v711
          %v713 = vpop.f32.mrb[0].mxu0
          %714 = vmatprep.mubr.f32.mxu0 0.0
          %715 = vmatmul.mubr.f32.gmra.mrb[0].mxu0 %v493
          %v716 = vpop.f32.mrb[0].mxu0
          %v717 = vadd.f32 %v335, %v716
          %v718 = vpop.f32.mrb[0].mxu0
          %719 = vmatprep.mubr.f32.mxu0 0.0
          %720 = vmatmul.mubr.f32.gmra.mrb[0].mxu0 %v496
          %v721 = vpop.f32.mrb[0].mxu0
          %v722 = vadd.f32 %v335, %v721
          %v723 = vpop.f32.mrb[0].mxu0
          %724 = vmatprep.mubr.f32.mxu0 0.0
          %725 = vmatmul.mubr.f32.gmra.mrb[0].mxu0 %v499
          %v726 = vpop.f32.mrb[0].mxu0
          %v727 = vadd.f32 %v335, %v726
          %v728 = vpop.f32.mrb[0].mxu0
          %729 = vdwg.mxu0
          %v730 = vpack.c.bf16 %v577, %v572
          %v731 = vpack.c.bf16 %v587, %v582
          %v732 = vpack.c.bf16 %v597, %v592
          %v733 = vpack.c.bf16 %v607, %v602
          %v734 = vpack.c.bf16 %v617, %v612
          %v735 = vpack.c.bf16 %v627, %v622
          %v736 = vpack.c.bf16 %v637, %v632
          %v737 = vpack.c.bf16 %v647, %v642
          %v738 = vpack.c.bf16 %v657, %v652
          %v739 = vpack.c.bf16 %v667, %v662
          %v740 = vpack.c.bf16 %v677, %v672
          %v741 = vpack.c.bf16 %v687, %v682
          %v742 = vpack.c.bf16 %v697, %v692
          %v743 = vpack.c.bf16 %v707, %v702
          %v744 = vpack.c.bf16 %v717, %v712
          %v745 = vpack.c.bf16 %v727, %v722
          %vm746 = vcmask 7168
          %747 = vst.msk [vmem:[#allocation2] sm:$0xff] %vm746, %v730
          %748 = vst.msk [vmem:[#allocation2 + $0x8] sm:$0xff] %vm746, %v731
          %749 = vst.msk [vmem:[#allocation2 + $0x10] sm:$0xff] %vm746, %v732
          %750 = vst.msk [vmem:[#allocation2 + $0x18] sm:$0xff] %vm746, %v733
          %751 = vst.msk [vmem:[#allocation2 + $0x20] sm:$0xff] %vm746, %v734
          %752 = vst.msk [vmem:[#allocation2 + $0x28] sm:$0xff] %vm746, %v735
          %753 = vst.msk [vmem:[#allocation2 + $0x30] sm:$0xff] %vm746, %v736
          %754 = vst.msk [vmem:[#allocation2 + $0x38] sm:$0xff] %vm746, %v737
          %755 = vst.msk [vmem:[#allocation2 + $0x40] sm:$0xff] %vm746, %v738
          %756 = vst.msk [vmem:[#allocation2 + $0x48] sm:$0xff] %vm746, %v739
          %757 = vst.msk [vmem:[#allocation2 + $0x50] sm:$0xff] %vm746, %v740
          %758 = vst.msk [vmem:[#allocation2 + $0x58] sm:$0xff] %vm746, %v741
          %759 = vst.msk [vmem:[#allocation2 + $0x60] sm:$0xff] %vm746, %v742
          %760 = vst.msk [vmem:[#allocation2 + $0x68] sm:$0xff] %vm746, %v743
          %761 = vst.msk [vmem:[#allocation2 + $0x70] sm:$0xff] %vm746, %v744
          %762 = vst.msk [vmem:[#allocation2 + $0x78] sm:$0xff] %vm746, %v745
          %v763 = vld [vmem:[%s5] sm:$0x1f]
          %v764 = vld [vmem:[%s6] sm:$0x1f]
          %766 = vset.pattern.permute.xlu0 0
          %767 = vperm.xlu0 %766, %v764
          %v768 = vpop.permute.xlu0 %767
          %v771 = vsel %vm404, %v763, 0
          %v773 = vsel %vm501, %v328, 0
          %v775 = vsel %vm501, %v338, 0
          %777 = vmatprep.subr.mxu0 %v775
          %778 = vmatpush1.msra.mxu0 %v773
          %779 = vmatprep.subr.mxu0 0.0
          %780 = vmatpush1.msra.mxu0 0.0
          %781 = vmatprep.subr.mxu0 0.0
          %782 = vmatpush1.msra.mxu0 0.0
          %783 = vmatprep.subr.mxu0 0.0
          %784 = vmatpush1.msra.mxu0 0.0
          %785 = vmatprep.subr.mxu0 0.0
          %786 = vmatpush1.msra.mxu0 0.0
          %787 = vmatprep.subr.mxu0 0.0
          %788 = vmatpush1.msra.mxu0 0.0
          %789 = vmatprep.subr.mxu0 0.0
          %790 = vmatpush1.msra.mxu0 0.0
          %791 = vmatprep.subr.mxu0 0.0
          %792 = vmatpush1.msra.mxu0 0.0
          %793 = vmatprep.subr.mxu0 0.0
          %794 = vmatpush1.msra.mxu0 0.0
          %795 = vmatprep.subr.mxu0 0.0
          %796 = vmatpush1.msra.mxu0 0.0
          %797 = vmatprep.subr.mxu0 0.0
          %798 = vmatpush1.msra.mxu0 0.0
          %799 = vmatprep.subr.mxu0 0.0
          %800 = vmatpush1.msra.mxu0 0.0
          %801 = vmatprep.subr.mxu0 0.0
          %802 = vmatpush1.msra.mxu0 0.0
          %803 = vmatprep.subr.mxu0 0.0
          %804 = vmatpush1.msra.mxu0 0.0
          %805 = vmatprep.subr.mxu0 0.0
          %806 = vmatpush1.msra.mxu0 0.0
          %807 = vmatprep.subr.mxu0 0.0
          %808 = vmatpush1.msra.mxu0 0.0
          %809 = vmatprep.subr.mxu0 0.0
          %810 = vmatpush1.msra.mxu0 0.0
          %811 = vmatprep.subr.mxu0 0.0
          %812 = vmatpush1.msra.mxu0 0.0
          %813 = vmatprep.subr.mxu0 0.0
          %814 = vmatpush1.msra.mxu0 0.0
          %815 = vmatprep.subr.mxu0 0.0
          %816 = vmatpush1.msra.mxu0 0.0
          %817 = vmatprep.subr.mxu0 0.0
          %818 = vmatpush1.msra.mxu0 0.0
          %819 = vmatprep.subr.mxu0 0.0
          %820 = vmatpush1.msra.mxu0 0.0
          %821 = vmatprep.subr.mxu0 0.0
          %822 = vmatpush1.msra.mxu0 0.0
          %823 = vmatprep.subr.mxu0 0.0
          %824 = vmatpush1.msra.mxu0 0.0
          %825 = vmatprep.subr.mxu0 0.0
          %826 = vmatpush1.msra.mxu0 0.0
          %827 = vmatprep.subr.mxu0 0.0
          %828 = vmatpush1.msra.mxu0 0.0
          %829 = vmatprep.subr.mxu0 0.0
          %830 = vmatpush1.msra.mxu0 0.0
          %831 = vmatprep.subr.mxu0 0.0
          %832 = vmatpush1.msra.mxu0 0.0
          %833 = vmatprep.subr.mxu0 0.0
          %834 = vmatpush1.msra.mxu0 0.0
          %835 = vmatprep.subr.mxu0 0.0
          %836 = vmatpush1.msra.mxu0 0.0
          %837 = vmatprep.subr.mxu0 0.0
          %838 = vmatpush1.msra.mxu0 0.0
          %839 = vmatprep.subr.mxu0 0.0
          %840 = vmatpush1.msra.mxu0 0.0
          %841 = vmatprep.mubr.f32.mxu0 0.0
          %842 = vmatmul.mubr.f32.gmra.mrb[0].mxu0 %v771
          %v843 = vpop.f32.mrb[0].mxu0
          %v844 = vadd.f32 %v768, %v843
          %v845 = vpop.f32.mrb[0].mxu0
          %v846 = vadd.f32 %v768, %v845
          %847 = vdwg.mxu0
          %v848 = vpack.c.bf16 %v844, %v844
          %v849 = vpack.c.bf16 %v846, %v846
          %v852 = vunpack.c.l.b16 %v848
          %v853 = vunpack.c.l.b16 %v849
          %v854 = vpack.c.b16 %v853, %v852
          %vm856 = vcmask 1042432
          %vm857 = vsmask.f32 2304
          %vm858 = vmand %vm856, %vm857
          %vm859 = vcmask 1046532
          %vm860 = vsmask.f32 6400
          %vm861 = vmand %vm859, %vm860
          %vm862 = vmor %vm861, %vm858
          %v863 = vld [vmem:[#allocation3] sm:$0x77]
          %v864 = vsel %vm862, %v854, %v863
          %865 = vst [vmem:[#allocation3] sm:$0x77] %v864
        $region56: #{tpu_custom_call.1} parent=51 // pred_fallthru
          _
        %s866 = smul.u32 %s32, 128
        %s867 = sshra.s32 %s866, 7
        %s868 = sand.u32 %s866, 127
        %s869 = smul.addr %s867, 4
        %s870 = scalar_lea.vmem %s322, %s869
        %v871 = vld [vmem:[%s870] sm:$0xf]
        %v872 = vld [vmem:[%s1] sm:$0x1]
        %v873 = vld [vmem:[#allocation4] sm:$0x1]
        %875 = vset.pattern.permute.xlu0 0
        %876 = vperm.xlu0 %875, %v873
        %v877 = vpop.permute.xlu0 %876
        %v879 = vlaneseq
        %v880 = vshrl.u32 %v879, 7
        %v881 = vsub.s32 0, %v880
        %v882 = vrot.slane %v877, %v881
        %vm883 = vcmask 31744
        %v885 = vsel %vm883, %v872, 0
        %vm887 = vcmask 1043456
        %v889 = vsel %vm887, %v871, 0
        %891 = vmatprep.subr.mxu0 0.0
        %892 = vmatpush1.msra.mxu0 %v889
        %893 = vmatprep.subr.mxu0 0.0
        %894 = vmatpush1.msra.mxu0 0.0
        %895 = vmatprep.subr.mxu0 0.0
        %896 = vmatpush1.msra.mxu0 0.0
        %897 = vmatprep.subr.mxu0 0.0
        %898 = vmatpush1.msra.mxu0 0.0
        %899 = vmatprep.subr.mxu0 0.0
        %900 = vmatpush1.msra.mxu0 0.0
        %901 = vmatprep.subr.mxu0 0.0
        %902 = vmatpush1.msra.mxu0 0.0
        %903 = vmatprep.subr.mxu0 0.0
        %904 = vmatpush1.msra.mxu0 0.0
        %905 = vmatprep.subr.mxu0 0.0
        %906 = vmatpush1.msra.mxu0 0.0
        %907 = vmatprep.subr.mxu0 0.0
        %908 = vmatpush1.msra.mxu0 0.0
        %909 = vmatprep.subr.mxu0 0.0
        %910 = vmatpush1.msra.mxu0 0.0
        %911 = vmatprep.subr.mxu0 0.0
        %912 = vmatpush1.msra.mxu0 0.0
        %913 = vmatprep.subr.mxu0 0.0
        %914 = vmatpush1.msra.mxu0 0.0
        %915 = vmatprep.subr.mxu0 0.0
        %916 = vmatpush1.msra.mxu0 0.0
        %917 = vmatprep.subr.mxu0 0.0
        %918 = vmatpush1.msra.mxu0 0.0
        %919 = vmatprep.subr.mxu0 0.0
        %920 = vmatpush1.msra.mxu0 0.0
        %921 = vmatprep.subr.mxu0 0.0
        %922 = vmatpush1.msra.mxu0 0.0
        %923 = vmatprep.subr.mxu0 0.0
        %924 = vmatpush1.msra.mxu0 0.0
        %925 = vmatprep.subr.mxu0 0.0
        %926 = vmatpush1.msra.mxu0 0.0
        %927 = vmatprep.subr.mxu0 0.0
        %928 = vmatpush1.msra.mxu0 0.0
        %929 = vmatprep.subr.mxu0 0.0
        %930 = vmatpush1.msra.mxu0 0.0
        %931 = vmatprep.subr.mxu0 0.0
        %932 = vmatpush1.msra.mxu0 0.0
        %933 = vmatprep.subr.mxu0 0.0
        %934 = vmatpush1.msra.mxu0 0.0
        %935 = vmatprep.subr.mxu0 0.0
        %936 = vmatpush1.msra.mxu0 0.0
        %937 = vmatprep.subr.mxu0 0.0
        %938 = vmatpush1.msra.mxu0 0.0
        %939 = vmatprep.subr.mxu0 0.0
        %940 = vmatpush1.msra.mxu0 0.0
        %941 = vmatprep.subr.mxu0 0.0
        %942 = vmatpush1.msra.mxu0 0.0
        %943 = vmatprep.subr.mxu0 0.0
        %944 = vmatpush1.msra.mxu0 0.0
        %945 = vmatprep.subr.mxu0 0.0
        %946 = vmatpush1.msra.mxu0 0.0
        %947 = vmatprep.subr.mxu0 0.0
        %948 = vmatpush1.msra.mxu0 0.0
        %949 = vmatprep.subr.mxu0 0.0
        %950 = vmatpush1.msra.mxu0 0.0
        %951 = vmatprep.subr.mxu0 0.0
        %952 = vmatpush1.msra.mxu0 0.0
        %953 = vmatprep.subr.mxu0 0.0
        %954 = vmatpush1.msra.mxu0 0.0
        %955 = vmatprep.mubr.f32.mxu0 0.0
        %956 = vmatmul.mubr.f32.gmra.mrb[0].mxu0 %v885
        %v957 = vpop.f32.mrb[0].mxu0
        %v958 = vadd.f32 %v882, %v957
        %v959 = vpop.f32.mrb[0].mxu0
        %960 = vdwg.mxu0
        %v961 = vld [vmem:[#allocation2] sm:$0xff]
        %v962 = vld [vmem:[#allocation2 + $0x8] sm:$0xff]
        %v963 = vld [vmem:[#allocation2 + $0x10] sm:$0xff]
        %v964 = vld [vmem:[#allocation2 + $0x18] sm:$0xff]
        %v965 = vld [vmem:[#allocation2 + $0x20] sm:$0xff]
        %v966 = vld [vmem:[#allocation2 + $0x28] sm:$0xff]
        %v967 = vld [vmem:[#allocation2 + $0x30] sm:$0xff]
        %v968 = vld [vmem:[#allocation2 + $0x38] sm:$0xff]
        %v969 = vld [vmem:[#allocation2 + $0x40] sm:$0xff]
        %v970 = vld [vmem:[#allocation2 + $0x48] sm:$0xff]
        %v971 = vld [vmem:[#allocation2 + $0x50] sm:$0xff]
        %v972 = vld [vmem:[#allocation2 + $0x58] sm:$0xff]
        %v973 = vld [vmem:[#allocation2 + $0x60] sm:$0xff]
        %v974 = vld [vmem:[#allocation2 + $0x68] sm:$0xff]
        %v975 = vld [vmem:[#allocation2 + $0x70] sm:$0xff]
        %v976 = vld [vmem:[#allocation2 + $0x78] sm:$0xff]
        %v977 = vpack.c.bf16 %v958, %v958
        %vm978 = vcmask 7168
        %v980 = vsel %vm978, %v961, 0
        %v983 = vsel %vm978, %v962, 0
        %v986 = vsel %vm978, %v963, 0
        %v989 = vsel %vm978, %v964, 0
        %v992 = vsel %vm978, %v965, 0
        %v995 = vsel %vm978, %v966, 0
        %v998 = vsel %vm978, %v967, 0
        %v1001 = vsel %vm978, %v968, 0
        %v1004 = vsel %vm978, %v969, 0
        %v1007 = vsel %vm978, %v970, 0
        %v1010 = vsel %vm978, %v971, 0
        %v1013 = vsel %vm978, %v972, 0
        %v1016 = vsel %vm978, %v973, 0
        %v1019 = vsel %vm978, %v974, 0
        %v1022 = vsel %vm978, %v975, 0
        %v1025 = vsel %vm978, %v976, 0
        %vm1027 = vcmask 1040384
        %v1028 = vsel 0, 4294967295, 65535
        %v1029 = vsel %vm1027, %v1028, 0
        %v1031 = vand.u32 %v977, %v1029
        %1033 = vmatprep.subr.bf16.mxu0 0
        %1034 = vmatpush1.bf16.msra.mxu0 %v1031
        %1035 = vmatprep.subr.bf16.mxu0 0
        %1036 = vmatpush1.bf16.msra.mxu0 0
        %1037 = vmatprep.subr.bf16.mxu0 0
        %1038 = vmatpush1.bf16.msra.mxu0 0
        %1039 = vmatprep.subr.bf16.mxu0 0
        %1040 = vmatpush1.bf16.msra.mxu0 0
        %1041 = vmatprep.subr.bf16.mxu0 0
        %1042 = vmatpush1.bf16.msra.mxu0 0
        %1043 = vmatprep.subr.bf16.mxu0 0
        %1044 = vmatpush1.bf16.msra.mxu0 0
        %1045 = vmatprep.subr.bf16.mxu0 0
        %1046 = vmatpush1.bf16.msra.mxu0 0
        %1047 = vmatprep.subr.bf16.mxu0 0
        %1048 = vmatpush1.bf16.msra.mxu0 0
        %1049 = vmatprep.subr.bf16.mxu0 0
        %1050 = vmatpush1.bf16.msra.mxu0 0
        %1051 = vmatprep.subr.bf16.mxu0 0
        %1052 = vmatpush1.bf16.msra.mxu0 0
        %1053 = vmatprep.subr.bf16.mxu0 0
        %1054 = vmatpush1.bf16.msra.mxu0 0
        %1055 = vmatprep.subr.bf16.mxu0 0
        %1056 = vmatpush1.bf16.msra.mxu0 0
        %1057 = vmatprep.subr.bf16.mxu0 0
        %1058 = vmatpush1.bf16.msra.mxu0 0
        %1059 = vmatprep.subr.bf16.mxu0 0
        %1060 = vmatpush1.bf16.msra.mxu0 0
        %1061 = vmatprep.subr.bf16.mxu0 0
        %1062 = vmatpush1.bf16.msra.mxu0 0
        %1063 = vmatprep.subr.bf16.mxu0 0
        %1064 = vmatpush1.bf16.msra.mxu0 0
        %1065 = vmatprep.mubr.bf16.mxu0 0
        %1066 = vmatmul.mubr.bf16.gmra.mrb[0].mxu0 %v980
        %v1067 = vpop.f32.mrb[0].mxu0
        %v1068 = vadd.f32 0.0, %v1067
        %v1069 = vpop.f32.mrb[0].mxu0
        %v1070 = vpop.f32.mrb[0].mxu0
        %v1071 = vadd.f32 0.0, %v1070
        %v1072 = vpop.f32.mrb[0].mxu0
        %1073 = vmatprep.mubr.bf16.mxu0 0
        %1074 = vmatmul.mubr.bf16.gmra.mrb[0].mxu0 %v983
        %v1075 = vpop.f32.mrb[0].mxu0
        %v1076 = vadd.f32 0.0, %v1075
        %v1077 = vpop.f32.mrb[0].mxu0
        %v1078 = vpop.f32.mrb[0].mxu0
        %v1079 = vadd.f32 0.0, %v1078
        %v1080 = vpop.f32.mrb[0].mxu0
        %1081 = vmatprep.mubr.bf16.mxu0 0
        %1082 = vmatmul.mubr.bf16.gmra.mrb[0].mxu0 %v986
        %v1083 = vpop.f32.mrb[0].mxu0
        %v1084 = vadd.f32 0.0, %v1083
        %v1085 = vpop.f32.mrb[0].mxu0
        %v1086 = vpop.f32.mrb[0].mxu0
        %v1087 = vadd.f32 0.0, %v1086
        %v1088 = vpop.f32.mrb[0].mxu0
        %1089 = vmatprep.mubr.bf16.mxu0 0
        %1090 = vmatmul.mubr.bf16.gmra.mrb[0].mxu0 %v989
        %v1091 = vpop.f32.mrb[0].mxu0
        %v1092 = vadd.f32 0.0, %v1091
        %v1093 = vpop.f32.mrb[0].mxu0
        %v1094 = vpop.f32.mrb[0].mxu0
        %v1095 = vadd.f32 0.0, %v1094
        %v1096 = vpop.f32.mrb[0].mxu0
        %1097 = vmatprep.mubr.bf16.mxu0 0
        %1098 = vmatmul.mubr.bf16.gmra.mrb[0].mxu0 %v992
        %v1099 = vpop.f32.mrb[0].mxu0
        %v1100 = vadd.f32 0.0, %v1099
        %v1101 = vpop.f32.mrb[0].mxu0
        %v1102 = vpop.f32.mrb[0].mxu0
        %v1103 = vadd.f32 0.0, %v1102
        %v1104 = vpop.f32.mrb[0].mxu0
        %1105 = vmatprep.mubr.bf16.mxu0 0
        %1106 = vmatmul.mubr.bf16.gmra.mrb[0].mxu0 %v995
        %v1107 = vpop.f32.mrb[0].mxu0
        %v1108 = vadd.f32 0.0, %v1107
        %v1109 = vpop.f32.mrb[0].mxu0
        %v1110 = vpop.f32.mrb[0].mxu0
        %v1111 = vadd.f32 0.0, %v1110
        %v1112 = vpop.f32.mrb[0].mxu0
        %1113 = vmatprep.mubr.bf16.mxu0 0
        %1114 = vmatmul.mubr.bf16.gmra.mrb[0].mxu0 %v998
        %v1115 = vpop.f32.mrb[0].mxu0
        %v1116 = vadd.f32 0.0, %v1115
        %v1117 = vpop.f32.mrb[0].mxu0
        %v1118 = vpop.f32.mrb[0].mxu0
        %v1119 = vadd.f32 0.0, %v1118
        %v1120 = vpop.f32.mrb[0].mxu0
        %1121 = vmatprep.mubr.bf16.mxu0 0
        %1122 = vmatmul.mubr.bf16.gmra.mrb[0].mxu0 %v1001
        %v1123 = vpop.f32.mrb[0].mxu0
        %v1124 = vadd.f32 0.0, %v1123
        %v1125 = vpop.f32.mrb[0].mxu0
        %v1126 = vpop.f32.mrb[0].mxu0
        %v1127 = vadd.f32 0.0, %v1126
        %v1128 = vpop.f32.mrb[0].mxu0
        %1129 = vmatprep.mubr.bf16.mxu0 0
        %1130 = vmatmul.mubr.bf16.gmra.mrb[0].mxu0 %v1004
        %v1131 = vpop.f32.mrb[0].mxu0
        %v1132 = vadd.f32 0.0, %v1131
        %v1133 = vpop.f32.mrb[0].mxu0
        %v1134 = vpop.f32.mrb[0].mxu0
        %v1135 = vadd.f32 0.0, %v1134
        %v1136 = vpop.f32.mrb[0].mxu0
        %1137 = vmatprep.mubr.bf16.mxu0 0
        %1138 = vmatmul.mubr.bf16.gmra.mrb[0].mxu0 %v1007
        %v1139 = vpop.f32.mrb[0].mxu0
        %v1140 = vadd.f32 0.0, %v1139
        %v1141 = vpop.f32.mrb[0].mxu0
        %v1142 = vpop.f32.mrb[0].mxu0
        %v1143 = vadd.f32 0.0, %v1142
        %v1144 = vpop.f32.mrb[0].mxu0
        %1145 = vmatprep.mubr.bf16.mxu0 0
        %1146 = vmatmul.mubr.bf16.gmra.mrb[0].mxu0 %v1010
        %v1147 = vpop.f32.mrb[0].mxu0
        %v1148 = vadd.f32 0.0, %v1147
        %v1149 = vpop.f32.mrb[0].mxu0
        %v1150 = vpop.f32.mrb[0].mxu0
        %v1151 = vadd.f32 0.0, %v1150
        %v1152 = vpop.f32.mrb[0].mxu0
        %1153 = vmatprep.mubr.bf16.mxu0 0
        %1154 = vmatmul.mubr.bf16.gmra.mrb[0].mxu0 %v1013
        %v1155 = vpop.f32.mrb[0].mxu0
        %v1156 = vadd.f32 0.0, %v1155
        %v1157 = vpop.f32.mrb[0].mxu0
        %v1158 = vpop.f32.mrb[0].mxu0
        %v1159 = vadd.f32 0.0, %v1158
        %v1160 = vpop.f32.mrb[0].mxu0
        %1161 = vmatprep.mubr.bf16.mxu0 0
        %1162 = vmatmul.mubr.bf16.gmra.mrb[0].mxu0 %v1016
        %v1163 = vpop.f32.mrb[0].mxu0
        %v1164 = vadd.f32 0.0, %v1163
        %v1165 = vpop.f32.mrb[0].mxu0
        %v1166 = vpop.f32.mrb[0].mxu0
        %v1167 = vadd.f32 0.0, %v1166
        %v1168 = vpop.f32.mrb[0].mxu0
        %1169 = vmatprep.mubr.bf16.mxu0 0
        %1170 = vmatmul.mubr.bf16.gmra.mrb[0].mxu0 %v1019
        %v1171 = vpop.f32.mrb[0].mxu0
        %v1172 = vadd.f32 0.0, %v1171
        %v1173 = vpop.f32.mrb[0].mxu0
        %v1174 = vpop.f32.mrb[0].mxu0
        %v1175 = vadd.f32 0.0, %v1174
        %v1176 = vpop.f32.mrb[0].mxu0
        %1177 = vmatprep.mubr.bf16.mxu0 0
        %1178 = vmatmul.mubr.bf16.gmra.mrb[0].mxu0 %v1022
        %v1179 = vpop.f32.mrb[0].mxu0
        %v1180 = vadd.f32 0.0, %v1179
        %v1181 = vpop.f32.mrb[0].mxu0
        %v1182 = vpop.f32.mrb[0].mxu0
        %v1183 = vadd.f32 0.0, %v1182
        %v1184 = vpop.f32.mrb[0].mxu0
        %1185 = vmatprep.mubr.bf16.mxu0 0
        %1186 = vmatmul.mubr.bf16.gmra.mrb[0].mxu0 %v1025
        %v1187 = vpop.f32.mrb[0].mxu0
        %v1188 = vadd.f32 0.0, %v1187
        %v1189 = vpop.f32.mrb[0].mxu0
        %v1190 = vpop.f32.mrb[0].mxu0
        %v1191 = vadd.f32 0.0, %v1190
        %v1192 = vpop.f32.mrb[0].mxu0
        %1193 = vdwg.mxu0
        %v1194 = vmax.f32 %v1068, 0.0
        %v1195 = vmax.f32 %v1071, 0.0
        %v1196 = vmax.f32 %v1076, 0.0
        %v1197 = vmax.f32 %v1079, 0.0
        %v1198 = vmax.f32 %v1084, 0.0
        %v1199 = vmax.f32 %v1087, 0.0
        %v1200 = vmax.f32 %v1092, 0.0
        %v1201 = vmax.f32 %v1095, 0.0
        %v1202 = vmax.f32 %v1100, 0.0
        %v1203 = vmax.f32 %v1103, 0.0
        %v1204 = vmax.f32 %v1108, 0.0
        %v1205 = vmax.f32 %v1111, 0.0
        %v1206 = vmax.f32 %v1116, 0.0
        %v1207 = vmax.f32 %v1119, 0.0
        %v1208 = vmax.f32 %v1124, 0.0
        %v1209 = vmax.f32 %v1127, 0.0
        %v1210 = vmax.f32 %v1132, 0.0
        %v1211 = vmax.f32 %v1135, 0.0
        %v1212 = vmax.f32 %v1140, 0.0
        %v1213 = vmax.f32 %v1143, 0.0
        %v1214 = vmax.f32 %v1148, 0.0
        %v1215 = vmax.f32 %v1151, 0.0
        %v1216 = vmax.f32 %v1156, 0.0
        %v1217 = vmax.f32 %v1159, 0.0
        %v1218 = vmax.f32 %v1164, 0.0
        %v1219 = vmax.f32 %v1167, 0.0
        %v1220 = vmax.f32 %v1172, 0.0
        %v1221 = vmax.f32 %v1175, 0.0
        %v1222 = vmax.f32 %v1180, 0.0
        %v1223 = vmax.f32 %v1183, 0.0
        %v1224 = vmax.f32 %v1188, 0.0
        %v1225 = vmax.f32 %v1191, 0.0
        %v1226 = vpack.c.bf16 %v1195, %v1194
        %v1227 = vpack.c.bf16 %v1197, %v1196
        %v1228 = vpack.c.bf16 %v1199, %v1198
        %v1229 = vpack.c.bf16 %v1201, %v1200
        %v1230 = vpack.c.bf16 %v1203, %v1202
        %v1231 = vpack.c.bf16 %v1205, %v1204
        %v1232 = vpack.c.bf16 %v1207, %v1206
        %v1233 = vpack.c.bf16 %v1209, %v1208
        %v1234 = vpack.c.bf16 %v1211, %v1210
        %v1235 = vpack.c.bf16 %v1213, %v1212
        %v1236 = vpack.c.bf16 %v1215, %v1214
        %v1237 = vpack.c.bf16 %v1217, %v1216
        %v1238 = vpack.c.bf16 %v1219, %v1218
        %v1239 = vpack.c.bf16 %v1221, %v1220
        %v1240 = vpack.c.bf16 %v1223, %v1222
        %v1241 = vpack.c.bf16 %v1225, %v1224
        %v1242 = vld [vmem:[#allocation3] sm:$0x77]
        %v1244 = vunpack.c.l.b16 %v1242
        %v1245 = vunpack.c.h.b16 %v1242
        %v1246 = vpack.c.b16 %v1244, %v1244
        %v1247 = vpack.c.b16 %v1245, %v1245
        %1250 = vmatprep.subr.bf16.mxu0 0
        %1251 = vmatpush1.bf16.msra.mxu0 %v1226
        %1252 = vmatprep.subr.bf16.mxu0 0
        %1253 = vmatpush1.bf16.msra.mxu0 %v1227
        %1254 = vmatprep.subr.bf16.mxu0 0
        %1255 = vmatpush1.bf16.msra.mxu0 %v1228
        %1256 = vmatprep.subr.bf16.mxu0 0
        %1257 = vmatpush1.bf16.msra.mxu0 %v1229
        %1258 = vmatprep.subr.bf16.mxu0 0
        %1259 = vmatpush1.bf16.msra.mxu0 %v1230
        %1260 = vmatprep.subr.bf16.mxu0 0
        %1261 = vmatpush1.bf16.msra.mxu0 %v1231
        %1262 = vmatprep.subr.bf16.mxu0 0
        %1263 = vmatpush1.bf16.msra.mxu0 %v1232
        %1264 = vmatprep.subr.bf16.mxu0 0
        %1265 = vmatpush1.bf16.msra.mxu0 %v1233
        %1266 = vmatprep.subr.bf16.mxu0 0
        %1267 = vmatpush1.bf16.msra.mxu0 %v1234
        %1268 = vmatprep.subr.bf16.mxu0 0
        %1269 = vmatpush1.bf16.msra.mxu0 %v1235
        %1270 = vmatprep.subr.bf16.mxu0 0
        %1271 = vmatpush1.bf16.msra.mxu0 %v1236
        %1272 = vmatprep.subr.bf16.mxu0 0
        %1273 = vmatpush1.bf16.msra.mxu0 %v1237
        %1274 = vmatprep.subr.bf16.mxu0 0
        %1275 = vmatpush1.bf16.msra.mxu0 %v1238
        %1276 = vmatprep.subr.bf16.mxu0 0
        %1277 = vmatpush1.bf16.msra.mxu0 %v1239
        %1278 = vmatprep.subr.bf16.mxu0 0
        %1279 = vmatpush1.bf16.msra.mxu0 %v1240
        %1280 = vmatprep.subr.bf16.mxu0 0
        %1281 = vmatpush1.bf16.msra.mxu0 %v1241
        %1282 = vmatprep.mubr.bf16.mxu0 %v1247
        %1283 = vmatmul.mubr.bf16.gmra.mrb[0].mxu0 %v1246
        %v1284 = vpop.f32.mrb[0].mxu0
        %v1285 = vadd.f32 0.0, %v1284
        %v1286 = vpop.f32.mrb[0].mxu0
        %v1287 = vpop.f32.mrb[0].mxu0
        %v1288 = vpop.f32.mrb[0].mxu0
        %1289 = vdwg.mxu0
        %v1290 = vmax.f32 %v1285, 1e-12
        %v1291 = vrcp.pop %v1290
        %v1292 = vlaneseq
        %v1293 = vshrl.u32 %v1292, 7
        %v1294 = vsub.s32 4, %v1293
        %v1295 = vrot.slane %v1291, %v1294
        %v1296 = vmul.f32 %v1285, %v1295
        %s1297 = sld [smem:[#allocation6]]
        %v1298 = vstv %s1297
        %v1299 = vmul.f32 %v1298, %v1296
        %v1300 = vadd.f32 %v1299, %v871
        %1301 = vst [vmem:[%s317] sm:$0xf] %v1300
        %s1302 = sand.u32 %s222, 1
        %s1303 = scalar_lea.sflag [#allocation8], %s1302
        %s1304 = sand.u32 %s222, 1
        %s1305 = smul.addr %s1304, 4
        %s1306 = scalar_lea.vmem [#allocation7], %s1305
        // Predicated region
        $region57: #{tpu_custom_call.1} parent=51 // pred_check
          %p1307 = pneg %p232
        $region58: #{tpu_custom_call.1} parent=51 // pred_check_branch
          %1309 = sbr.rel (%p1307) target = $region60
        $region59: #{tpu_custom_call.1} parent=51 // pred_region
          %s1311 = ssub.s32 64, 64
          %1312 = vsyncadd %s1303, %s1311
          %s1313 = smul.addr %s31, 2
          %s1314 = sadd.s32 %s32, %s1313
          %s1315 = smul.addr %s1314, 64
          %s1316 = scalar_lea.hbm %s8, %s1315
          %s1318 = sshll.u32 %s1306, 4
          %s1319 = int_to_ptr.vmem [resolvable:$true] %s1318
          %1321 = dma.vmem_to_hbm [thread:$0]  %s1319, 64, %s1316, %s1303
        $region60: #{tpu_custom_call.1} parent=51 // pred_fallthru
          _
      $region52: #{tpu_custom_call.1} parent=5 // pred_fallthru
        _
      %p1322 = scmp.le.s32.totalorder 2, %s22
      // Predicated region
      $region61: #{tpu_custom_call.1} parent=5 // pred_check
        %p1323 = pneg %p1322
      $region62: #{tpu_custom_call.1} parent=5 // pred_check_branch
        %1325 = sbr.rel (%p1323) target = $region64
      $region63: #{tpu_custom_call.1} parent=5 // pred_region
        %s1326 = ssub.s32 %s22, 2
        // Predicated region
        $region65: #{tpu_custom_call.1} parent=63 // pred_check
          %p1327 = pneg %p238
        $region66: #{tpu_custom_call.1} parent=63 // pred_check_branch
          %1329 = sbr.rel (%p1327) target = $region68
        $region67: #{tpu_custom_call.1} parent=63 // pred_region
          %s1330 = sand.u32 %s223, 1
          %s1331 = scalar_lea.sflag [#allocation8], %s1330
          %s1332 = sand.u32 %s223, 1
          %s1333 = smul.addr %s1332, 4
          %s1334 = scalar_lea.vmem [#allocation7], %s1333
          %1335 = dma.done %s1331, 64
        $region68: #{tpu_custom_call.1} parent=63 // pred_fallthru
          _
      $region64: #{tpu_custom_call.1} parent=5 // pred_fallthru
        _
    $region6: #{tpu_custom_call.1} parent=1 // loop_footer
      %s26 = sadd.s32 1, %s22
    $region7: #{tpu_custom_call.1} parent=1 // loop_footer_branch
      %21 = sbr.rel target = $region3
    $region8: #{tpu_custom_call.1} parent=1 // loop_exit
      _
    %1336 = vsyncpa [#allocation8], 1
    %s1337 = scalar_lea.sflag [#allocation8], 1
    %1338 = vsyncpa %s1337, 1

</llo_original>
